<compile_context>
chip_gen: v5e
topology: v5e:2x2
jax: 0.10.0
libtpu: 0.0.40
codegen_flags: <defaults>
</compile_context>

<pallas_src>
import functools

import jax
import jax.numpy as jnp
from jax.experimental import pallas as pl
from jax.experimental.pallas import tpu as pltpu

_EPS = 1e-5
_NEG_SLOPE = 0.2


# ----------------------------------------------------------------------------
# In-kernel helper: 3x3 "same" conv of one image held in VMEM.
# Zero halo built functionally (no HBM padded copy); 9 taps gathered into a
# single im2col matrix so the MXU sees one matmul with K = 9*C.
# ----------------------------------------------------------------------------
def _conv3x3_same_from_act(act, w_flat, compute_dtype):
    # act: (H, W, C) float32 value, w_flat: (9*C, Cout)
    h, w, c = act.shape
    zrow = jnp.zeros((1, w, c), act.dtype)
    zcol = jnp.zeros((h + 2, 1, c), act.dtype)
    p = jnp.concatenate([zrow, act, zrow], axis=0)        # (H+2, W,   C)
    p = jnp.concatenate([zcol, p, zcol], axis=1)          # (H+2, W+2, C)
    cols = [p[ky:ky + h, kx:kx + w, :] for ky in range(3) for kx in range(3)]
    patch = jnp.concatenate(cols, axis=-1).reshape(h * w, 9 * c)
    return jnp.dot(patch.astype(compute_dtype), w_flat.astype(compute_dtype),
                   preferred_element_type=jnp.float32)    # (H*W, Cout) f32


# ----------------------------------------------------------------------------
# Stage 1: fused 2x2 maxpool + conv1 + BN1 partial stats.  Grid over batch.
# Input layout: (N*Hp, 2, Wp, 2*Cin) -- the 2x2 pool window folded into dims
# by a free wrapper reshape, so pooling is pure elementwise max in-kernel.
# ----------------------------------------------------------------------------
def _pool_conv_stats_kernel(x_ref, w_ref, y_ref, stats_ref, *, compute_dtype):
    # x_ref: (Hp, 2, Wp, 2*Cin)  w_ref: (9*Cin, Cmid)
    # y_ref: (1, Hp, Wp, Cmid)   stats_ref: (1, 2, Cmid)
    hp, wp, cmid = y_ref.shape[1], y_ref.shape[2], y_ref.shape[3]
    cin = x_ref.shape[3] // 2

    xx = x_ref[...].astype(jnp.float32)                   # (Hp, 2, Wp, 2*Cin)
    rows = jnp.maximum(xx[:, 0, :, :], xx[:, 1, :, :])    # pooled over H
    pooled = jnp.maximum(rows[:, :, :cin], rows[:, :, cin:])  # pooled over W

    y = _conv3x3_same_from_act(pooled, w_ref[...], compute_dtype)  # (Hp*Wp, Cmid)

    y_ref[0] = y.reshape(hp, wp, cmid).astype(y_ref.dtype)
    s = jnp.sum(y, axis=0, keepdims=True)
    sq = jnp.sum(y * y, axis=0, keepdims=True)
    stats_ref[0] = jnp.concatenate([s, sq], axis=0)


def _pool_conv1(x_nhwc, w1, compute_dtype):
    n, h, w_sp, cin = x_nhwc.shape
    hp, wp = h // 2, w_sp // 2
    cmid = w1.shape[-1]
    # Free HBM reshape: fold the 2x2 pooling window into the dims.
    x4 = x_nhwc.reshape(n * hp, 2, wp, 2 * cin)
    w_flat = w1.reshape(9 * cin, cmid)
    kern = functools.partial(_pool_conv_stats_kernel, compute_dtype=compute_dtype)
    y1, stats = pl.pallas_call(
        kern,
        grid=(n,),
        in_specs=[
            pl.BlockSpec((hp, 2, wp, 2 * cin), lambda i: (i, 0, 0, 0)),
            pl.BlockSpec((9 * cin, cmid), lambda i: (0, 0)),
        ],
        out_specs=(
            pl.BlockSpec((1, hp, wp, cmid), lambda i: (i, 0, 0, 0)),
            pl.BlockSpec((1, 2, cmid), lambda i: (i, 0, 0)),
        ),
        out_shape=(
            jax.ShapeDtypeStruct((n, hp, wp, cmid), jnp.float32),
            jax.ShapeDtypeStruct((n, 2, cmid), jnp.float32),
        ),
        compiler_params=pltpu.CompilerParams(dimension_semantics=("parallel",)),
    )(x4, w_flat)
    return y1, stats


# ----------------------------------------------------------------------------
# Stage 2: fused BN1 affine + LeakyReLU + conv2 + BN2 partial stats.
# ----------------------------------------------------------------------------
def _bn_lrelu_conv_stats_kernel(y1_ref, scale_ref, shift_ref, w_ref,
                                y2_ref, stats_ref, *, compute_dtype):
    hp, wp, cout = y2_ref.shape[1], y2_ref.shape[2], y2_ref.shape[3]
    cmid = y1_ref.shape[3]

    z = y1_ref[0].astype(jnp.float32)
    scale = scale_ref[...].reshape(1, 1, cmid)
    shift = shift_ref[...].reshape(1, 1, cmid)
    z = z * scale + shift
    z = jnp.where(z >= 0, z, _NEG_SLOPE * z)

    y = _conv3x3_same_from_act(z, w_ref[...], compute_dtype)      # (Hp*Wp, Cout)

    y2_ref[0] = y.reshape(hp, wp, cout).astype(y2_ref.dtype)
    s = jnp.sum(y, axis=0, keepdims=True)
    sq = jnp.sum(y * y, axis=0, keepdims=True)
    stats_ref[0] = jnp.concatenate([s, sq], axis=0)


def _bn_lrelu_conv2(y1, scale1, shift1, w2, compute_dtype):
    n, hp, wp, cmid = y1.shape
    cout = w2.shape[-1]
    w_flat = w2.reshape(9 * cmid, cout)
    kern = functools.partial(_bn_lrelu_conv_stats_kernel, compute_dtype=compute_dtype)
    y2, stats = pl.pallas_call(
        kern,
        grid=(n,),
        in_specs=[
            pl.BlockSpec((1, hp, wp, cmid), lambda i: (i, 0, 0, 0)),
            pl.BlockSpec((1, cmid), lambda i: (0, 0)),
            pl.BlockSpec((1, cmid), lambda i: (0, 0)),
            pl.BlockSpec((9 * cmid, cout), lambda i: (0, 0)),
        ],
        out_specs=(
            pl.BlockSpec((1, hp, wp, cout), lambda i: (i, 0, 0, 0)),
            pl.BlockSpec((1, 2, cout), lambda i: (i, 0, 0)),
        ),
        out_shape=(
            jax.ShapeDtypeStruct((n, hp, wp, cout), jnp.float32),
            jax.ShapeDtypeStruct((n, 2, cout), jnp.float32),
        ),
        compiler_params=pltpu.CompilerParams(dimension_semantics=("parallel",)),
    )(y1, scale1, shift1, w_flat)
    return y2, stats


# ----------------------------------------------------------------------------
# Stage 3: lane-dense BN2 affine + LeakyReLU (elementwise), row-block grid.
# ----------------------------------------------------------------------------
def _bn_lrelu_apply_kernel(y_ref, scale_ref, shift_ref, o_ref):
    z = y_ref[...].astype(jnp.float32) * scale_ref[...] + shift_ref[...]
    o_ref[...] = jnp.where(z >= 0, z, _NEG_SLOPE * z).astype(o_ref.dtype)


def _bn_lrelu_apply(y_nhwc, scale, shift, out_dtype):
    n, h, w_sp, c = y_nhwc.shape
    rows, cols = n * h, w_sp * c
    flat = y_nhwc.reshape(rows, cols)            # lane-dense: last dim = W*C
    scale_t = jnp.tile(scale.reshape(1, c), (1, w_sp))   # per-channel -> (1, W*C)
    shift_t = jnp.tile(shift.reshape(1, c), (1, w_sp))
    blk = rows if rows <= 512 else 512
    out = pl.pallas_call(
        _bn_lrelu_apply_kernel,
        grid=(pl.cdiv(rows, blk),),
        in_specs=[
            pl.BlockSpec((blk, cols), lambda i: (i, 0)),
            pl.BlockSpec((1, cols), lambda i: (0, 0)),
            pl.BlockSpec((1, cols), lambda i: (0, 0)),
        ],
        out_specs=pl.BlockSpec((blk, cols), lambda i: (i, 0)),
        out_shape=jax.ShapeDtypeStruct((rows, cols), out_dtype),
        compiler_params=pltpu.CompilerParams(dimension_semantics=("parallel",)),
    )(flat, scale_t, shift_t)
    return out.reshape(n, h, w_sp, c)


# ----------------------------------------------------------------------------
# BN stats finalize (tiny: (N, 2, C) -> per-channel scale/shift), pure JAX.
# ----------------------------------------------------------------------------
def _bn_scale_shift(stats, gamma, beta, count):
    s = jnp.sum(stats[:, 0, :], axis=0)
    sq = jnp.sum(stats[:, 1, :], axis=0)
    mean = s / count
    var = jnp.maximum(sq / count - mean * mean, 0.0)   # biased variance
    scale = gamma * jax.lax.rsqrt(var + _EPS)
    shift = beta - mean * scale
    return scale.reshape(1, -1), shift.reshape(1, -1)


# ----------------------------------------------------------------------------
# Down.forward
# ----------------------------------------------------------------------------
@functools.partial(jax.jit, static_argnames=("compute_dtype",))
def down_forward(x_nchw, params, compute_dtype=jnp.float32):
    # NCHW (PyTorch convention) -> NHWC (C on the TPU lane axis).
    x = jnp.transpose(x_nchw, (0, 2, 3, 1)).astype(jnp.float32)
    n, h, w_sp, _ = x.shape
    hp, wp = h // 2, w_sp // 2
    count = n * hp * wp

    # TODO(synk): for very large images, add H-row tiling with a 2-row halo
    # (overlapping blocks) so per-step VMEM stays under the v7x 64 MiB budget.
    y1, stats1 = _pool_conv1(x, params["w1"], compute_dtype)
    scale1, shift1 = _bn_scale_shift(stats1, params["gamma1"], params["beta1"], count)

    y2, stats2 = _bn_lrelu_conv2(y1, scale1, shift1, params["w2"], compute_dtype)
    scale2, shift2 = _bn_scale_shift(stats2, params["gamma2"], params["beta2"], count)

    out = _bn_lrelu_apply(y2, scale2, shift2, jnp.float32)
    return jnp.transpose(out, (0, 3, 1, 2))      # back to NCHW


# ----------------------------------------------------------------------------
# Pure-JAX reference (sanity check only).
# ----------------------------------------------------------------------------
def down_reference(x_nchw, params):
    x = jnp.transpose(x_nchw, (0, 2, 3, 1))
    n, h, w_sp, c = x.shape
    x = jnp.max(x.reshape(n, h // 2, 2, w_sp // 2, 2, c), axis=(2, 4))

    def conv_bn_lrelu(x, w, gamma, beta):
        y = jax.lax.conv_general_dilated(
            x, w, window_strides=(1, 1), padding="SAME",
            dimension_numbers=("NHWC", "HWIO", "NHWC"))
        mean = jnp.mean(y, axis=(0, 1, 2), keepdims=True)
        var = jnp.mean((y - mean) ** 2, axis=(0, 1, 2), keepdims=True)
        y = (y - mean) * jax.lax.rsqrt(var + _EPS) * gamma + beta
        return jnp.where(y >= 0, y, _NEG_SLOPE * y)

    x = conv_bn_lrelu(x, params["w1"], params["gamma1"], params["beta1"])
    x = conv_bn_lrelu(x, params["w2"], params["gamma2"], params["beta2"])
    return jnp.transpose(x, (0, 3, 1, 2))


if __name__ == "__main__":
    # Small shapes: batch=2, in_channels=4, out_channels=8, spatial=16x16.
    N, CIN, COUT, H, W = 2, 4, 8, 16, 16
    CMID = COUT  # DoubleConv default: mid_channels = out_channels

    key = jax.random.PRNGKey(0)
    k_x, k_w1, k_w2 = jax.random.split(key, 3)

    x = jax.random.normal(k_x, (N, CIN, H, W), dtype=jnp.float32)

    params = {
        # Conv weights stored HWIO; equivalent to Conv2d(kernel_size=3, bias=False).
        "w1": 0.1 * jax.random.normal(k_w1, (3, 3, CIN, CMID), dtype=jnp.float32),
        "w2": 0.1 * jax.random.normal(k_w2, (3, 3, CMID, COUT), dtype=jnp.float32),
        # BatchNorm2d default init: weight=1, bias=0.
        "gamma1": jnp.ones((CMID,), jnp.float32),
        "beta1": jnp.zeros((CMID,), jnp.float32),
        "gamma2": jnp.ones((COUT,), jnp.float32),
        "beta2": jnp.zeros((COUT,), jnp.float32),
    }

    out = jax.block_until_ready(down_forward(x, params))
    assert out.shape == (N, COUT, H // 2, W // 2), out.shape

    ref = jax.block_until_ready(down_reference(x, params))
    assert jnp.allclose(out, ref, rtol=1e-2, atol=1e-2), (
        float(jnp.max(jnp.abs(out - ref))))

    # bf16 MXU path (v6e/v7x recommendation): bf16 matmul inputs, f32 accum.
    out_bf16 = jax.block_until_ready(
        down_forward(x, params, compute_dtype=jnp.bfloat16))
    assert jnp.allclose(out_bf16, ref, rtol=1e-1, atol=1e-1), (
        float(jnp.max(jnp.abs(out_bf16 - ref))))

    print("KERNEL_OK")
</pallas_src>

<mosaic_0001>
module attributes {stable_mosaic.version = 11 : i64} {
  func.func @_pool_conv_stats_kernel(%arg0: i32, %arg1: memref<8x2x8x8xf32, #tpu.memory_space<vmem>>, %arg2: memref<36x8xf32, #tpu.memory_space<vmem>>, %arg3: memref<1x8x8x8xf32, #tpu.memory_space<vmem>>, %arg4: memref<1x2x8xf32, #tpu.memory_space<vmem>>) attributes {dimension_semantics = [#tpu.dimension_semantics<parallel>], iteration_bounds = array<i64: 2>, scalar_prefetch = 0 : i64, scratch_operands = 0 : i64, tpu.core_type = #tpu.core_type<tc>, window_params = [{transform_indices = @transform_0, window_bounds = array<i64: 8, 2, 8, 8>}, {pipeline_mode = #tpu.pipeline_mode<synchronous>, transform_indices = @transform_1, window_bounds = array<i64: 36, 8>}, {transform_indices = @transform_2, window_bounds = array<i64: 1, 8, 8, 8>}, {transform_indices = @transform_3, window_bounds = array<i64: 1, 2, 8>}]} {
    %c0 = arith.constant 0 : index
    %c0_0 = arith.constant 0 : index
    %c0_1 = arith.constant 0 : index
    %c0_2 = arith.constant 0 : index
    %0 = vector.load %arg1[%c0, %c0_0, %c0_1, %c0_2] : memref<8x2x8x8xf32, #tpu.memory_space<vmem>>, vector<8x2x8x8xf32>
    %1 = vector.extract_strided_slice %0 {offsets = [0, 0, 0, 0], sizes = [8, 1, 8, 8], strides = [1, 1, 1, 1]} : vector<8x2x8x8xf32> to vector<8x1x8x8xf32>
    %2 = vector.shape_cast %1 : vector<8x1x8x8xf32> to vector<8x8x8xf32>
    %3 = vector.extract_strided_slice %0 {offsets = [0, 1, 0, 0], sizes = [8, 1, 8, 8], strides = [1, 1, 1, 1]} : vector<8x2x8x8xf32> to vector<8x1x8x8xf32>
    %4 = vector.shape_cast %3 : vector<8x1x8x8xf32> to vector<8x8x8xf32>
    %5 = arith.maximumf %2, %4 : vector<8x8x8xf32>
    %6 = vector.extract_strided_slice %5 {offsets = [0, 0, 0], sizes = [8, 8, 4], strides = [1, 1, 1]} : vector<8x8x8xf32> to vector<8x8x4xf32>
    %7 = vector.extract_strided_slice %5 {offsets = [0, 0, 4], sizes = [8, 8, 4], strides = [1, 1, 1]} : vector<8x8x8xf32> to vector<8x8x4xf32>
    %8 = arith.maximumf %6, %7 : vector<8x8x4xf32>
    %c0_3 = arith.constant 0 : index
    %c0_4 = arith.constant 0 : index
    %9 = vector.load %arg2[%c0_3, %c0_4] : memref<36x8xf32, #tpu.memory_space<vmem>>, vector<36x8xf32>
    %cst = arith.constant 0.000000e+00 : f32
    %10 = vector.broadcast %cst : f32 to vector<1x8x4xf32>
    %cst_5 = arith.constant 0.000000e+00 : f32
    %11 = vector.broadcast %cst_5 : f32 to vector<10x1x4xf32>
    %12 = tpu.concatenate %10, %8, %10 in 0 : vector<1x8x4xf32>, vector<8x8x4xf32>, vector<1x8x4xf32> -> vector<10x8x4xf32>
    %13 = tpu.concatenate %11, %12, %11 in 1 : vector<10x1x4xf32>, vector<10x8x4xf32>, vector<10x1x4xf32> -> vector<10x10x4xf32>
    %14 = vector.extract_strided_slice %13 {offsets = [0, 0, 0], sizes = [8, 8, 4], strides = [1, 1, 1]} : vector<10x10x4xf32> to vector<8x8x4xf32>
    %15 = vector.extract_strided_slice %13 {offsets = [0, 1, 0], sizes = [8, 8, 4], strides = [1, 1, 1]} : vector<10x10x4xf32> to vector<8x8x4xf32>
    %16 = vector.extract_strided_slice %13 {offsets = [0, 2, 0], sizes = [8, 8, 4], strides = [1, 1, 1]} : vector<10x10x4xf32> to vector<8x8x4xf32>
    %17 = vector.extract_strided_slice %13 {offsets = [1, 0, 0], sizes = [8, 8, 4], strides = [1, 1, 1]} : vector<10x10x4xf32> to vector<8x8x4xf32>
    %18 = vector.extract_strided_slice %13 {offsets = [1, 1, 0], sizes = [8, 8, 4], strides = [1, 1, 1]} : vector<10x10x4xf32> to vector<8x8x4xf32>
    %19 = vector.extract_strided_slice %13 {offsets = [1, 2, 0], sizes = [8, 8, 4], strides = [1, 1, 1]} : vector<10x10x4xf32> to vector<8x8x4xf32>
    %20 = vector.extract_strided_slice %13 {offsets = [2, 0, 0], sizes = [8, 8, 4], strides = [1, 1, 1]} : vector<10x10x4xf32> to vector<8x8x4xf32>
    %21 = vector.extract_strided_slice %13 {offsets = [2, 1, 0], sizes = [8, 8, 4], strides = [1, 1, 1]} : vector<10x10x4xf32> to vector<8x8x4xf32>
    %22 = vector.extract_strided_slice %13 {offsets = [2, 2, 0], sizes = [8, 8, 4], strides = [1, 1, 1]} : vector<10x10x4xf32> to vector<8x8x4xf32>
    %23 = tpu.concatenate %14, %15, %16, %17, %18, %19, %20, %21, %22 in 2 : vector<8x8x4xf32>, vector<8x8x4xf32>, vector<8x8x4xf32>, vector<8x8x4xf32>, vector<8x8x4xf32>, vector<8x8x4xf32>, vector<8x8x4xf32>, vector<8x8x4xf32>, vector<8x8x4xf32> -> vector<8x8x36xf32>
    %24 = vector.shape_cast %23 : vector<8x8x36xf32> to vector<64x36xf32>
    %cst_6 = arith.constant dense<0.000000e+00> : vector<64x8xf32>
    %25 = tpu.matmul %24, %9, %cst_6 {dimension_numbers = #tpu.dot_dimension_numbers<[1], [0], [0], [1], [0, 0, 1, 1], [], []>} : vector<64x36xf32>, vector<36x8xf32>, vector<64x8xf32> -> vector<64x8xf32>
    %26 = vector.shape_cast %25 : vector<64x8xf32> to vector<8x8x8xf32>
    %c0_7 = arith.constant 0 : index
    %c0_8 = arith.constant 0 : index
    %c0_9 = arith.constant 0 : index
    %c0_10 = arith.constant 0 : index
    %27 = vector.load %arg3[%c0_7, %c0_8, %c0_9, %c0_10] : memref<1x8x8x8xf32, #tpu.memory_space<vmem>>, vector<1x8x8x8xf32>
    %28 = vector.shape_cast %27 : vector<1x8x8x8xf32> to vector<8x8x8xf32>
    %29 = vector.shape_cast %26 : vector<8x8x8xf32> to vector<1x8x8x8xf32>
    tpu.vector_store %arg3[%c0_7, %c0_8, %c0_9, %c0_10], %29 {strides = array<i32>} : memref<1x8x8x8xf32, #tpu.memory_space<vmem>>, vector<1x8x8x8xf32>,
    %cst_11 = arith.constant dense<0.000000e+00> : vector<8xf32>
    %30 = vector.multi_reduction <add>, %25, %cst_11 [0] : vector<64x8xf32> to vector<8xf32>
    %31 = vector.shape_cast %30 : vector<8xf32> to vector<1x8xf32>
    %32 = arith.mulf %25, %25 : vector<64x8xf32>
    %cst_12 = arith.constant dense<0.000000e+00> : vector<8xf32>
    %33 = vector.multi_reduction <add>, %32, %cst_12 [0] : vector<64x8xf32> to vector<8xf32>
    %34 = vector.shape_cast %33 : vector<8xf32> to vector<1x8xf32>
    %35 = tpu.concatenate %31, %34 in 0 : vector<1x8xf32>, vector<1x8xf32> -> vector<2x8xf32>
    %c0_13 = arith.constant 0 : index
    %c0_14 = arith.constant 0 : index
    %c0_15 = arith.constant 0 : index
    %36 = vector.load %arg4[%c0_13, %c0_14, %c0_15] : memref<1x2x8xf32, #tpu.memory_space<vmem>>, vector<1x2x8xf32>
    %37 = vector.shape_cast %36 : vector<1x2x8xf32> to vector<2x8xf32>
    %38 = vector.shape_cast %35 : vector<2x8xf32> to vector<1x2x8xf32>
    tpu.vector_store %arg4[%c0_13, %c0_14, %c0_15], %38 {strides = array<i32>} : memref<1x2x8xf32, #tpu.memory_space<vmem>>, vector<1x2x8xf32>,
    return
  }
  func.func @transform_0(%arg0: i32) -> (i32, i32, i32, i32) {
    %c0_i32 = arith.constant 0 : i32
    %c0_i32_0 = arith.constant 0 : i32
    %c0_i32_1 = arith.constant 0 : i32
    %c0_i32_2 = arith.constant 0 : i32
    return %arg0, %c0_i32, %c0_i32_0, %c0_i32_1 : i32, i32, i32, i32
  }
  func.func @transform_1(%arg0: i32) -> (i32, i32) {
    %c0_i32 = arith.constant 0 : i32
    %c0_i32_0 = arith.constant 0 : i32
    %c0_i32_1 = arith.constant 0 : i32
    return %c0_i32, %c0_i32_0 : i32, i32
  }
  func.func @transform_2(%arg0: i32) -> (i32, i32, i32, i32) {
    %c0_i32 = arith.constant 0 : i32
    %c0_i32_0 = arith.constant 0 : i32
    %c0_i32_1 = arith.constant 0 : i32
    %c0_i32_2 = arith.constant 0 : i32
    return %arg0, %c0_i32, %c0_i32_0, %c0_i32_1 : i32, i32, i32, i32
  }
  func.func @transform_3(%arg0: i32) -> (i32, i32, i32) {
    %c0_i32 = arith.constant 0 : i32
    %c0_i32_0 = arith.constant 0 : i32
    %c0_i32_1 = arith.constant 0 : i32
    return %arg0, %c0_i32, %c0_i32_0 : i32, i32, i32
  }
}

module attributes {stable_mosaic.version = 11 : i64} {
  func.func @_bn_lrelu_conv_stats_kernel(%arg0: i32, %arg1: memref<1x8x8x8xf32, #tpu.memory_space<vmem>>, %arg2: memref<1x8xf32, #tpu.memory_space<vmem>>, %arg3: memref<1x8xf32, #tpu.memory_space<vmem>>, %arg4: memref<72x8xf32, #tpu.memory_space<vmem>>, %arg5: memref<1x8x8x8xf32, #tpu.memory_space<vmem>>, %arg6: memref<1x2x8xf32, #tpu.memory_space<vmem>>) attributes {dimension_semantics = [#tpu.dimension_semantics<parallel>], iteration_bounds = array<i64: 2>, scalar_prefetch = 0 : i64, scratch_operands = 0 : i64, tpu.core_type = #tpu.core_type<tc>, window_params = [{transform_indices = @transform_0, window_bounds = array<i64: 1, 8, 8, 8>}, {pipeline_mode = #tpu.pipeline_mode<synchronous>, transform_indices = @transform_1, window_bounds = array<i64: 1, 8>}, {pipeline_mode = #tpu.pipeline_mode<synchronous>, transform_indices = @transform_2, window_bounds = array<i64: 1, 8>}, {pipeline_mode = #tpu.pipeline_mode<synchronous>, transform_indices = @transform_3, window_bounds = array<i64: 72, 8>}, {transform_indices = @transform_4, window_bounds = array<i64: 1, 8, 8, 8>}, {transform_indices = @transform_5, window_bounds = array<i64: 1, 2, 8>}]} {
    %c0 = arith.constant 0 : index
    %c0_0 = arith.constant 0 : index
    %c0_1 = arith.constant 0 : index
    %c0_2 = arith.constant 0 : index
    %0 = vector.load %arg1[%c0, %c0_0, %c0_1, %c0_2] : memref<1x8x8x8xf32, #tpu.memory_space<vmem>>, vector<1x8x8x8xf32>
    %1 = vector.shape_cast %0 : vector<1x8x8x8xf32> to vector<8x8x8xf32>
    %c0_3 = arith.constant 0 : index
    %c0_4 = arith.constant 0 : index
    %2 = vector.load %arg2[%c0_3, %c0_4] : memref<1x8xf32, #tpu.memory_space<vmem>>, vector<1x8xf32>
    %3 = vector.shape_cast %2 : vector<1x8xf32> to vector<1x1x8xf32>
    %c0_5 = arith.constant 0 : index
    %c0_6 = arith.constant 0 : index
    %4 = vector.load %arg3[%c0_5, %c0_6] : memref<1x8xf32, #tpu.memory_space<vmem>>, vector<1x8xf32>
    %5 = vector.shape_cast %4 : vector<1x8xf32> to vector<1x1x8xf32>
    %6 = vector.broadcast %3 : vector<1x1x8xf32> to vector<8x8x8xf32>
    %7 = arith.mulf %1, %6 : vector<8x8x8xf32>
    %8 = vector.broadcast %5 : vector<1x1x8xf32> to vector<8x8x8xf32>
    %9 = arith.addf %7, %8 : vector<8x8x8xf32>
    %cst = arith.constant 0.000000e+00 : f32
    %10 = vector.broadcast %cst : f32 to vector<8x8x8xf32>
    %11 = arith.cmpf oge, %9, %10 : vector<8x8x8xf32>
    %cst_7 = arith.constant 2.000000e-01 : f32
    %12 = vector.broadcast %cst_7 : f32 to vector<8x8x8xf32>
    %13 = arith.mulf %12, %9 : vector<8x8x8xf32>
    %14 = arith.select %11, %9, %13 : vector<8x8x8xi1>, vector<8x8x8xf32>
    %c0_8 = arith.constant 0 : index
    %c0_9 = arith.constant 0 : index
    %15 = vector.load %arg4[%c0_8, %c0_9] : memref<72x8xf32, #tpu.memory_space<vmem>>, vector<72x8xf32>
    %cst_10 = arith.constant 0.000000e+00 : f32
    %16 = vector.broadcast %cst_10 : f32 to vector<1x8x8xf32>
    %cst_11 = arith.constant 0.000000e+00 : f32
    %17 = vector.broadcast %cst_11 : f32 to vector<10x1x8xf32>
    %18 = tpu.concatenate %16, %14, %16 in 0 : vector<1x8x8xf32>, vector<8x8x8xf32>, vector<1x8x8xf32> -> vector<10x8x8xf32>
    %19 = tpu.concatenate %17, %18, %17 in 1 : vector<10x1x8xf32>, vector<10x8x8xf32>, vector<10x1x8xf32> -> vector<10x10x8xf32>
    %20 = vector.extract_strided_slice %19 {offsets = [0, 0, 0], sizes = [8, 8, 8], strides = [1, 1, 1]} : vector<10x10x8xf32> to vector<8x8x8xf32>
    %21 = vector.extract_strided_slice %19 {offsets = [0, 1, 0], sizes = [8, 8, 8], strides = [1, 1, 1]} : vector<10x10x8xf32> to vector<8x8x8xf32>
    %22 = vector.extract_strided_slice %19 {offsets = [0, 2, 0], sizes = [8, 8, 8], strides = [1, 1, 1]} : vector<10x10x8xf32> to vector<8x8x8xf32>
    %23 = vector.extract_strided_slice %19 {offsets = [1, 0, 0], sizes = [8, 8, 8], strides = [1, 1, 1]} : vector<10x10x8xf32> to vector<8x8x8xf32>
    %24 = vector.extract_strided_slice %19 {offsets = [1, 1, 0], sizes = [8, 8, 8], strides = [1, 1, 1]} : vector<10x10x8xf32> to vector<8x8x8xf32>
    %25 = vector.extract_strided_slice %19 {offsets = [1, 2, 0], sizes = [8, 8, 8], strides = [1, 1, 1]} : vector<10x10x8xf32> to vector<8x8x8xf32>
    %26 = vector.extract_strided_slice %19 {offsets = [2, 0, 0], sizes = [8, 8, 8], strides = [1, 1, 1]} : vector<10x10x8xf32> to vector<8x8x8xf32>
    %27 = vector.extract_strided_slice %19 {offsets = [2, 1, 0], sizes = [8, 8, 8], strides = [1, 1, 1]} : vector<10x10x8xf32> to vector<8x8x8xf32>
    %28 = vector.extract_strided_slice %19 {offsets = [2, 2, 0], sizes = [8, 8, 8], strides = [1, 1, 1]} : vector<10x10x8xf32> to vector<8x8x8xf32>
    %29 = tpu.concatenate %20, %21, %22, %23, %24, %25, %26, %27, %28 in 2 : vector<8x8x8xf32>, vector<8x8x8xf32>, vector<8x8x8xf32>, vector<8x8x8xf32>, vector<8x8x8xf32>, vector<8x8x8xf32>, vector<8x8x8xf32>, vector<8x8x8xf32>, vector<8x8x8xf32> -> vector<8x8x72xf32>
    %30 = vector.shape_cast %29 : vector<8x8x72xf32> to vector<64x72xf32>
    %cst_12 = arith.constant dense<0.000000e+00> : vector<64x8xf32>
    %31 = tpu.matmul %30, %15, %cst_12 {dimension_numbers = #tpu.dot_dimension_numbers<[1], [0], [0], [1], [0, 0, 1, 1], [], []>} : vector<64x72xf32>, vector<72x8xf32>, vector<64x8xf32> -> vector<64x8xf32>
    %32 = vector.shape_cast %31 : vector<64x8xf32> to vector<8x8x8xf32>
    %c0_13 = arith.constant 0 : index
    %c0_14 = arith.constant 0 : index
    %c0_15 = arith.constant 0 : index
    %c0_16 = arith.constant 0 : index
    %33 = vector.load %arg5[%c0_13, %c0_14, %c0_15, %c0_16] : memref<1x8x8x8xf32, #tpu.memory_space<vmem>>, vector<1x8x8x8xf32>
    %34 = vector.shape_cast %33 : vector<1x8x8x8xf32> to vector<8x8x8xf32>
    %35 = vector.shape_cast %32 : vector<8x8x8xf32> to vector<1x8x8x8xf32>
    tpu.vector_store %arg5[%c0_13, %c0_14, %c0_15, %c0_16], %35 {strides = array<i32>} : memref<1x8x8x8xf32, #tpu.memory_space<vmem>>, vector<1x8x8x8xf32>,
    %cst_17 = arith.constant dense<0.000000e+00> : vector<8xf32>
    %36 = vector.multi_reduction <add>, %31, %cst_17 [0] : vector<64x8xf32> to vector<8xf32>
    %37 = vector.shape_cast %36 : vector<8xf32> to vector<1x8xf32>
    %38 = arith.mulf %31, %31 : vector<64x8xf32>
    %cst_18 = arith.constant dense<0.000000e+00> : vector<8xf32>
    %39 = vector.multi_reduction <add>, %38, %cst_18 [0] : vector<64x8xf32> to vector<8xf32>
    %40 = vector.shape_cast %39 : vector<8xf32> to vector<1x8xf32>
    %41 = tpu.concatenate %37, %40 in 0 : vector<1x8xf32>, vector<1x8xf32> -> vector<2x8xf32>
    %c0_19 = arith.constant 0 : index
    %c0_20 = arith.constant 0 : index
    %c0_21 = arith.constant 0 : index
    %42 = vector.load %arg6[%c0_19, %c0_20, %c0_21] : memref<1x2x8xf32, #tpu.memory_space<vmem>>, vector<1x2x8xf32>
    %43 = vector.shape_cast %42 : vector<1x2x8xf32> to vector<2x8xf32>
    %44 = vector.shape_cast %41 : vector<2x8xf32> to vector<1x2x8xf32>
    tpu.vector_store %arg6[%c0_19, %c0_20, %c0_21], %44 {strides = array<i32>} : memref<1x2x8xf32, #tpu.memory_space<vmem>>, vector<1x2x8xf32>,
    return
  }
  func.func @transform_0(%arg0: i32) -> (i32, i32, i32, i32) {
    %c0_i32 = arith.constant 0 : i32
    %c0_i32_0 = arith.constant 0 : i32
    %c0_i32_1 = arith.constant 0 : i32
    %c0_i32_2 = arith.constant 0 : i32
    return %arg0, %c0_i32, %c0_i32_0, %c0_i32_1 : i32, i32, i32, i32
  }
  func.func @transform_1(%arg0: i32) -> (i32, i32) {
    %c0_i32 = arith.constant 0 : i32
    %c0_i32_0 = arith.constant 0 : i32
    %c0_i32_1 = arith.constant 0 : i32
    return %c0_i32, %c0_i32_0 : i32, i32
  }
  func.func @transform_2(%arg0: i32) -> (i32, i32) {
    %c0_i32 = arith.constant 0 : i32
    %c0_i32_0 = arith.constant 0 : i32
    %c0_i32_1 = arith.constant 0 : i32
    return %c0_i32, %c0_i32_0 : i32, i32
  }
  func.func @transform_3(%arg0: i32) -> (i32, i32) {
    %c0_i32 = arith.constant 0 : i32
    %c0_i32_0 = arith.constant 0 : i32
    %c0_i32_1 = arith.constant 0 : i32
    return %c0_i32, %c0_i32_0 : i32, i32
  }
  func.func @transform_4(%arg0: i32) -> (i32, i32, i32, i32) {
    %c0_i32 = arith.constant 0 : i32
    %c0_i32_0 = arith.constant 0 : i32
    %c0_i32_1 = arith.constant 0 : i32
    %c0_i32_2 = arith.constant 0 : i32
    return %arg0, %c0_i32, %c0_i32_0, %c0_i32_1 : i32, i32, i32, i32
  }
  func.func @transform_5(%arg0: i32) -> (i32, i32, i32) {
    %c0_i32 = arith.constant 0 : i32
    %c0_i32_0 = arith.constant 0 : i32
    %c0_i32_1 = arith.constant 0 : i32
    return %arg0, %c0_i32, %c0_i32_0 : i32, i32, i32
  }
}

module attributes {stable_mosaic.version = 11 : i64} {
  func.func @_bn_lrelu_apply_kernel(%arg0: i32, %arg1: memref<16x64xf32, #tpu.memory_space<vmem>>, %arg2: memref<1x64xf32, #tpu.memory_space<vmem>>, %arg3: memref<1x64xf32, #tpu.memory_space<vmem>>, %arg4: memref<16x64xf32, #tpu.memory_space<vmem>>) attributes {dimension_semantics = [#tpu.dimension_semantics<parallel>], iteration_bounds = array<i64: 1>, scalar_prefetch = 0 : i64, scratch_operands = 0 : i64, tpu.core_type = #tpu.core_type<tc>, window_params = [{transform_indices = @transform_0, window_bounds = array<i64: 16, 64>}, {pipeline_mode = #tpu.pipeline_mode<synchronous>, transform_indices = @transform_1, window_bounds = array<i64: 1, 64>}, {pipeline_mode = #tpu.pipeline_mode<synchronous>, transform_indices = @transform_2, window_bounds = array<i64: 1, 64>}, {transform_indices = @transform_3, window_bounds = array<i64: 16, 64>}]} {
    %c0 = arith.constant 0 : index
    %c0_0 = arith.constant 0 : index
    %0 = vector.load %arg1[%c0, %c0_0] : memref<16x64xf32, #tpu.memory_space<vmem>>, vector<16x64xf32>
    %c0_1 = arith.constant 0 : index
    %c0_2 = arith.constant 0 : index
    %1 = vector.load %arg2[%c0_1, %c0_2] : memref<1x64xf32, #tpu.memory_space<vmem>>, vector<1x64xf32>
    %2 = vector.broadcast %1 : vector<1x64xf32> to vector<16x64xf32>
    %3 = arith.mulf %0, %2 : vector<16x64xf32>
    %c0_3 = arith.constant 0 : index
    %c0_4 = arith.constant 0 : index
    %4 = vector.load %arg3[%c0_3, %c0_4] : memref<1x64xf32, #tpu.memory_space<vmem>>, vector<1x64xf32>
    %5 = vector.broadcast %4 : vector<1x64xf32> to vector<16x64xf32>
    %6 = arith.addf %3, %5 : vector<16x64xf32>
    %cst = arith.constant 0.000000e+00 : f32
    %7 = vector.broadcast %cst : f32 to vector<16x64xf32>
    %8 = arith.cmpf oge, %6, %7 : vector<16x64xf32>
    %cst_5 = arith.constant 2.000000e-01 : f32
    %9 = vector.broadcast %cst_5 : f32 to vector<16x64xf32>
    %10 = arith.mulf %9, %6 : vector<16x64xf32>
    %11 = arith.select %8, %6, %10 : vector<16x64xi1>, vector<16x64xf32>
    %c0_6 = arith.constant 0 : index
    %c0_7 = arith.constant 0 : index
    %12 = vector.load %arg4[%c0_6, %c0_7] : memref<16x64xf32, #tpu.memory_space<vmem>>, vector<16x64xf32>
    tpu.vector_store %arg4[%c0_6, %c0_7], %11 {strides = array<i32>} : memref<16x64xf32, #tpu.memory_space<vmem>>, vector<16x64xf32>,
    return
  }
  func.func @transform_0(%arg0: i32) -> (i32, i32) {
    %c0_i32 = arith.constant 0 : i32
    %c0_i32_0 = arith.constant 0 : i32
    return %arg0, %c0_i32 : i32, i32
  }
  func.func @transform_1(%arg0: i32) -> (i32, i32) {
    %c0_i32 = arith.constant 0 : i32
    %c0_i32_0 = arith.constant 0 : i32
    %c0_i32_1 = arith.constant 0 : i32
    return %c0_i32, %c0_i32_0 : i32, i32
  }
  func.func @transform_2(%arg0: i32) -> (i32, i32) {
    %c0_i32 = arith.constant 0 : i32
    %c0_i32_0 = arith.constant 0 : i32
    %c0_i32_1 = arith.constant 0 : i32
    return %c0_i32, %c0_i32_0 : i32, i32
  }
  func.func @transform_3(%arg0: i32) -> (i32, i32) {
    %c0_i32 = arith.constant 0 : i32
    %c0_i32_0 = arith.constant 0 : i32
    return %arg0, %c0_i32 : i32, i32
  }
}

</mosaic_0001>

<llo_original>
// kernel: down_forward.3
$region0: #{down_forward.3}
  #allocation0 [shape = 'u32[]', space=smem, size = 0x4, offset = 0x4, fixed_abs, tag = 'smem constant byte address 0x4 - core index']
  #allocation1 [shape = 'u32[72,128]{1,0:T(1,128)}', space=vmem, size = 0x9000, scoped, tag = 'internal scratch']
  %s0 = inlined_call_operand.vmem [shape: f32[16,2,8,8], index: 0, kind: input, shape index: {}]
  %s1 = inlined_call_operand.vmem [shape: f32[36,8], index: 1, kind: input, shape index: {}]
  %s2 = inlined_call_operand.vmem [shape: f32[2,8,8,8], index: 2, kind: output, shape index: {0}]
  %s3 = inlined_call_operand.vmem [shape: f32[2,2,8], index: 3, kind: output, shape index: {1}]
  %4 = xla_tuple %s2, %s3
  %s5 = sld [smem:[#allocation0]]
  $region49: #{down_forward.3} parent=0
    _
  %s7 = ssub.s32 1, %s5
  %s8 = scalar_select 0, %s7, %s5
  loop: start=0, step=1, limit=4
  $region2: #{down_forward.3} parent=0 // loop_pre_header
    _
  $region3: #{down_forward.3} parent=0 // loop_header
    %s10 = sphi 0, %s14
    %p11 = scmp.ge.s32.totalorder %s10, 4
    %s20 = sphi 0, %s22
    %s23 = sphi 0, %s20
    %s24 = sphi 0, %s23
    %s40 = sphi 0, %s24
    %s44 = sphi 0, %s44
    %s46 = sphi 0, %s44
    %s47 = sphi 0, %s46
    %s61 = sphi 0, %s47
    %s67 = sphi 0, %s69
    %s70 = sphi 0, %s67
    %s71 = sphi 0, %s70
    %s87 = sphi 0, %s71
    %s93 = sphi 0, %s95
    %s96 = sphi 0, %s93
    %s97 = sphi 0, %s96
    %s113 = sphi 0, %s97
  $region4: #{down_forward.3} parent=0 // loop_header_branch
    %13 = sbr.rel (%p11) target = $region8
  $region5: #{down_forward.3} parent=0 // loop_body
    %s15 = ssub.s32 %s10, 1
    %s16 = ssub.s32 %s10, 2
    %s17 = sadd.s32 %s10, 1
    %s18 = ssub.s32 %s10, %s17
    %p19 = scmp.eq.s32.totalorder %s18, 0
    %s21 = sadd.s32 %s20, 1
    %s22 = scalar_select %p19, %s20, %s21
    %p25 = pneg %p19
    %p26 = scmp.eq.s32.totalorder %s10, 1
    %p27 = por %p25, %p26
    %p28 = scmp.ne.s32.totalorder %s20, %s23
    %p29 = scmp.eq.s32.totalorder %s10, 0
    %p30 = por %p28, %p29
    %p31 = scmp.ne.s32.totalorder %s20, %s23
    %p32 = scmp.eq.s32.totalorder %s15, 1
    %p33 = por %p31, %p32
    %p34 = scmp.ne.s32.totalorder %s23, %s24
    %p35 = scmp.eq.s32.totalorder %s15, 0
    %p36 = por %p34, %p35
    %p37 = scmp.ne.s32.totalorder %s23, %s24
    %p38 = scmp.eq.s32.totalorder %s16, 1
    %p39 = por %p37, %p38
    %p41 = scmp.ne.s32.totalorder %s24, %s40
    %p42 = scmp.eq.s32.totalorder %s16, 0
    %p43 = por %p41, %p42
    %s45 = sadd.s32 %s44, 1
    %p48 = scmp.eq.s32.totalorder %s10, 1
    %p49 = scmp.ne.s32.totalorder %s44, %s46
    %p50 = scmp.eq.s32.totalorder %s10, 0
    %p51 = por %p49, %p50
    %p52 = scmp.ne.s32.totalorder %s44, %s46
    %p53 = scmp.eq.s32.totalorder %s15, 1
    %p54 = por %p52, %p53
    %p55 = scmp.ne.s32.totalorder %s46, %s47
    %p56 = scmp.eq.s32.totalorder %s15, 0
    %p57 = por %p55, %p56
    %p58 = scmp.ne.s32.totalorder %s46, %s47
    %p59 = scmp.eq.s32.totalorder %s16, 1
    %p60 = por %p58, %p59
    %p62 = scmp.ne.s32.totalorder %s47, %s61
    %p63 = scmp.eq.s32.totalorder %s16, 0
    %p64 = por %p62, %p63
    %s65 = ssub.s32 %s10, %s17
    %p66 = scmp.eq.s32.totalorder %s65, 0
    %s68 = sadd.s32 %s67, 1
    %s69 = scalar_select %p66, %s67, %s68
    %p72 = pneg %p66
    %p73 = scmp.eq.s32.totalorder %s10, 1
    %p74 = por %p72, %p73
    %p75 = scmp.ne.s32.totalorder %s67, %s70
    %p76 = scmp.eq.s32.totalorder %s10, 0
    %p77 = por %p75, %p76
    %p78 = scmp.ne.s32.totalorder %s67, %s70
    %p79 = scmp.eq.s32.totalorder %s15, 1
    %p80 = por %p78, %p79
    %p81 = scmp.ne.s32.totalorder %s70, %s71
    %p82 = scmp.eq.s32.totalorder %s15, 0
    %p83 = por %p81, %p82
    %p84 = scmp.ne.s32.totalorder %s70, %s71
    %p85 = scmp.eq.s32.totalorder %s16, 1
    %p86 = por %p84, %p85
    %p88 = scmp.ne.s32.totalorder %s71, %s87
    %p89 = scmp.eq.s32.totalorder %s16, 0
    %p90 = por %p88, %p89
    %s91 = ssub.s32 %s10, %s17
    %p92 = scmp.eq.s32.totalorder %s91, 0
    %s94 = sadd.s32 %s93, 1
    %s95 = scalar_select %p92, %s93, %s94
    %p98 = pneg %p92
    %p99 = scmp.eq.s32.totalorder %s10, 1
    %p100 = por %p98, %p99
    %p101 = scmp.ne.s32.totalorder %s93, %s96
    %p102 = scmp.eq.s32.totalorder %s10, 0
    %p103 = por %p101, %p102
    %p104 = scmp.ne.s32.totalorder %s93, %s96
    %p105 = scmp.eq.s32.totalorder %s15, 1
    %p106 = por %p104, %p105
    %p107 = scmp.ne.s32.totalorder %s96, %s97
    %p108 = scmp.eq.s32.totalorder %s15, 0
    %p109 = por %p107, %p108
    %p110 = scmp.ne.s32.totalorder %s96, %s97
    %p111 = scmp.eq.s32.totalorder %s16, 1
    %p112 = por %p110, %p111
    %p114 = scmp.ne.s32.totalorder %s97, %s113
    %p115 = scmp.eq.s32.totalorder %s16, 0
    %p116 = por %p114, %p115
    %p117 = scmp.le.s32.totalorder 1, %s10
    %p118 = scmp.lt.s32.totalorder %s10, 3
    %p119 = pnand %p117, %p118
    %p120 = pneg %p119
    // Predicated region
    $region9: #{down_forward.3} parent=5 // pred_check
      _
    $region10: #{down_forward.3} parent=5 // pred_check_branch
      %122 = sbr.rel (%p119) target = $region12
    $region11: #{down_forward.3} parent=5 // pred_region
      %s123 = ssub.s32 %s10, 1
      // Predicated region
      $region13: #{down_forward.3} parent=11 // pred_check
        %p124 = pneg %p57
      $region14: #{down_forward.3} parent=11 // pred_check_branch
        %126 = sbr.rel (%p124) target = $region16
      $region15: #{down_forward.3} parent=11 // pred_region
        _
      $region16: #{down_forward.3} parent=11 // pred_fallthru
        _
    $region12: #{down_forward.3} parent=5 // pred_fallthru
      _
    %p127 = scmp.lt.s32.totalorder %s10, 2
    // Predicated region
    $region17: #{down_forward.3} parent=5 // pred_check
      %p128 = pneg %p127
    $region18: #{down_forward.3} parent=5 // pred_check_branch
      %130 = sbr.rel (%p128) target = $region20
    $region19: #{down_forward.3} parent=5 // pred_region
      // Predicated region
      $region21: #{down_forward.3} parent=19 // pred_check
        %p131 = pneg %p30
      $region22: #{down_forward.3} parent=19 // pred_check_branch
        %133 = sbr.rel (%p131) target = $region24
      $region23: #{down_forward.3} parent=19 // pred_region
        %s134 = smul.u32 8, %s10
        %p135 = scmp.lt.s32.totalorder %s134, 15
        %s136 = scalar_select %p135, %s134, 15
        %s137 = smul.addr %s136, 2
        %s138 = smul.addr %s137, 8
        %s139 = scalar_lea.vmem %s0, %s138
        %s140 = smul.u32 8, %s10
      $region24: #{down_forward.3} parent=19 // pred_fallthru
        _
    $region20: #{down_forward.3} parent=5 // pred_fallthru
      _
    %p141 = scmp.le.s32.totalorder 1, %s10
    %p142 = scmp.lt.s32.totalorder %s10, 3
    %p143 = pnand %p141, %p142
    %p144 = pneg %p143
    // Predicated region
    $region25: #{down_forward.3} parent=5 // pred_check
      _
    $region26: #{down_forward.3} parent=5 // pred_check_branch
      %146 = sbr.rel (%p143) target = $region28
    $region27: #{down_forward.3} parent=5 // pred_region
      %s147 = ssub.s32 %s10, 1
      %s148 = smul.u32 8, %s15
      %p149 = scmp.lt.s32.totalorder %s148, 15
      %s150 = scalar_select %p149, %s148, 15
      %s151 = smul.addr %s150, 2
      %s152 = smul.addr %s151, 8
      %s153 = scalar_lea.vmem %s0, %s152
      %p154 = pneg %p36
      %p155 = pneg %p33
      %p156 = pneg %p57
      %p157 = pneg %p54
      %p158 = pneg %p83
      %p159 = pneg %p80
      %p160 = scmp.lt.s32.totalorder %s15, 1
      %s161 = scalar_select %p160, %s15, 1
      %s162 = smul.addr %s161, 8
      %s163 = smul.addr %s162, 8
      %s164 = scalar_lea.vmem %s2, %s163
      %p165 = pneg %p109
      %p166 = pneg %p106
      %p167 = scmp.lt.s32.totalorder %s15, 1
      %s168 = scalar_select %p167, %s15, 1
      %s169 = smul.addr %s168, 2
      %s170 = scalar_lea.vmem %s3, %s169
      %s171 = smul.u32 8, %s15
      %p172 = scmp.lt.s32.totalorder %s171, 15
      %s173 = scalar_select %p172, %s171, 15
      %s174 = smul.addr %s173, 2
      %s175 = smul.addr %s174, 8
      %s176 = scalar_lea.vmem %s0, %s175
      %s177 = smul.u32 8, %s15
      %p178 = scmp.lt.s32.totalorder %s15, 1
      %s179 = scalar_select %p178, %s15, 1
      %s180 = smul.addr %s179, 8
      %s181 = smul.addr %s180, 8
      %s182 = scalar_lea.vmem %s2, %s181
      %p183 = scmp.lt.s32.totalorder %s15, 1
      %s184 = scalar_select %p183, %s15, 1
      %s185 = smul.addr %s184, 2
      %s186 = scalar_lea.vmem %s3, %s185
      %v187 = vld [vmem:[%s176] sm:$0xff]
      %v188 = vld [vmem:[%s176 + $0x8] sm:$0xff]
      %v189 = vld [vmem:[%s176 + $0x10] sm:$0xff]
      %v190 = vld [vmem:[%s176 + $0x18] sm:$0xff]
      %v191 = vld [vmem:[%s176 + $0x20] sm:$0xff]
      %v192 = vld [vmem:[%s176 + $0x28] sm:$0xff]
      %v193 = vld [vmem:[%s176 + $0x30] sm:$0xff]
      %v194 = vld [vmem:[%s176 + $0x38] sm:$0xff]
      %v195 = vld [vmem:[%s176 + $0x40] sm:$0xff]
      %v196 = vld [vmem:[%s176 + $0x48] sm:$0xff]
      %v197 = vld [vmem:[%s176 + $0x50] sm:$0xff]
      %v198 = vld [vmem:[%s176 + $0x58] sm:$0xff]
      %v199 = vld [vmem:[%s176 + $0x60] sm:$0xff]
      %v200 = vld [vmem:[%s176 + $0x68] sm:$0xff]
      %v201 = vld [vmem:[%s176 + $0x70] sm:$0xff]
      %v202 = vld [vmem:[%s176 + $0x78] sm:$0xff]
      %v203 = vmax.f32 %v187, %v188
      %v204 = vmax.f32 %v189, %v190
      %v205 = vmax.f32 %v191, %v192
      %v206 = vmax.f32 %v193, %v194
      %v207 = vmax.f32 %v195, %v196
      %v208 = vmax.f32 %v197, %v198
      %v209 = vmax.f32 %v199, %v200
      %v210 = vmax.f32 %v201, %v202
      %219 = vrot.lane.b32.xlu0 %v203, 124
      %v220 = vpop.permute.xlu0 %219
      %221 = vrot.lane.b32.xlu0 %v204, 124
      %v222 = vpop.permute.xlu0 %221
      %223 = vrot.lane.b32.xlu0 %v205, 124
      %v224 = vpop.permute.xlu0 %223
      %225 = vrot.lane.b32.xlu0 %v206, 124
      %v226 = vpop.permute.xlu0 %225
      %227 = vrot.lane.b32.xlu0 %v207, 124
      %v228 = vpop.permute.xlu0 %227
      %229 = vrot.lane.b32.xlu0 %v208, 124
      %v230 = vpop.permute.xlu0 %229
      %231 = vrot.lane.b32.xlu0 %v209, 124
      %v232 = vpop.permute.xlu0 %231
      %233 = vrot.lane.b32.xlu0 %v210, 124
      %v234 = vpop.permute.xlu0 %233
      %v243 = vmax.f32 %v203, %v220
      %v244 = vmax.f32 %v204, %v222
      %v245 = vmax.f32 %v205, %v224
      %v246 = vmax.f32 %v206, %v226
      %v247 = vmax.f32 %v207, %v228
      %v248 = vmax.f32 %v208, %v230
      %v249 = vmax.f32 %v209, %v232
      %v250 = vmax.f32 %v210, %v234
      %v251 = vld [vmem:[%s1] sm:$0xff]
      %v252 = vld [vmem:[%s1 + $0x8] sm:$0xff]
      %v253 = vld [vmem:[%s1 + $0x10] sm:$0xff]
      %v254 = vld [vmem:[%s1 + $0x18] sm:$0xff]
      %v255 = vld [vmem:[%s1 + $0x20] sm:$0xf]
      %v265 = vrot.slane 0.0, 7
      %v266 = vrot.slane %v243, 7
      %v267 = vrot.slane %v244, 7
      %v268 = vrot.slane %v245, 7
      %v269 = vrot.slane %v246, 7
      %v270 = vrot.slane %v247, 7
      %v271 = vrot.slane %v248, 7
      %v272 = vrot.slane %v249, 7
      %v273 = vrot.slane %v250, 7
      %vm283 = vcmask 1040384
      %v284 = vsel %vm283, 0.0, %v265
      %v285 = vsel %vm283, 0.0, %v266
      %v286 = vsel %vm283, 0.0, %v267
      %v287 = vsel %vm283, 0.0, %v268
      %v288 = vsel %vm283, 0.0, %v269
      %v289 = vsel %vm283, 0.0, %v270
      %v290 = vsel %vm283, 0.0, %v271
      %v291 = vsel %vm283, 0.0, %v272
      %v292 = vsel %vm283, 0.0, %v273
      %v293 = vsel %vm283, %v265, 0.0
      %v294 = vsel %vm283, %v266, 0.0
      %v295 = vsel %vm283, %v267, 0.0
      %v296 = vsel %vm283, %v268, 0.0
      %v297 = vsel %vm283, %v269, 0.0
      %v298 = vsel %vm283, %v270, 0.0
      %v299 = vsel %vm283, %v271, 0.0
      %v300 = vsel %vm283, %v272, 0.0
      %v301 = vsel %vm283, %v273, 0.0
      %vm318 = vcmask 1046528
      %v319 = vrot.slane %v284, 1
      %v320 = vrot.slane %v293, 1
      %v321 = vsel %vm318, %v319, %v320
      %v322 = vrot.slane %v285, 1
      %v323 = vrot.slane %v294, 1
      %v324 = vsel %vm318, %v322, %v323
      %v325 = vrot.slane %v286, 1
      %v326 = vrot.slane %v295, 1
      %v327 = vsel %vm318, %v325, %v326
      %v328 = vrot.slane %v287, 1
      %v329 = vrot.slane %v296, 1
      %v330 = vsel %vm318, %v328, %v329
      %v331 = vrot.slane %v288, 1
      %v332 = vrot.slane %v297, 1
      %v333 = vsel %vm318, %v331, %v332
      %v334 = vrot.slane %v289, 1
      %v335 = vrot.slane %v298, 1
      %v336 = vsel %vm318, %v334, %v335
      %v337 = vrot.slane %v290, 1
      %v338 = vrot.slane %v299, 1
      %v339 = vsel %vm318, %v337, %v338
      %v340 = vrot.slane %v291, 1
      %v341 = vrot.slane %v300, 1
      %v342 = vsel %vm318, %v340, %v341
      %343 = vrot.lane.b32.xlu0 %v321, 4
      %v344 = vpop.permute.xlu0 %343
      %345 = vrot.lane.b32.xlu0 %v324, 4
      %v346 = vpop.permute.xlu0 %345
      %347 = vrot.lane.b32.xlu0 %v327, 4
      %v348 = vpop.permute.xlu0 %347
      %349 = vrot.lane.b32.xlu0 %v330, 4
      %v350 = vpop.permute.xlu0 %349
      %351 = vrot.lane.b32.xlu0 %v333, 4
      %v352 = vpop.permute.xlu0 %351
      %353 = vrot.lane.b32.xlu0 %v336, 4
      %v354 = vpop.permute.xlu0 %353
      %355 = vrot.lane.b32.xlu0 %v339, 4
      %v356 = vpop.permute.xlu0 %355
      %357 = vrot.lane.b32.xlu0 %v342, 4
      %v358 = vpop.permute.xlu0 %357
      %vm367 = vcmask 1045504
      %v368 = vrot.slane %v284, 2
      %v369 = vrot.slane %v293, 2
      %v370 = vsel %vm367, %v368, %v369
      %v371 = vrot.slane %v285, 2
      %v372 = vrot.slane %v294, 2
      %v373 = vsel %vm367, %v371, %v372
      %v374 = vrot.slane %v286, 2
      %v375 = vrot.slane %v295, 2
      %v376 = vsel %vm367, %v374, %v375
      %v377 = vrot.slane %v287, 2
      %v378 = vrot.slane %v296, 2
      %v379 = vsel %vm367, %v377, %v378
      %v380 = vrot.slane %v288, 2
      %v381 = vrot.slane %v297, 2
      %v382 = vsel %vm367, %v380, %v381
      %v383 = vrot.slane %v289, 2
      %v384 = vrot.slane %v298, 2
      %v385 = vsel %vm367, %v383, %v384
      %v386 = vrot.slane %v290, 2
      %v387 = vrot.slane %v299, 2
      %v388 = vsel %vm367, %v386, %v387
      %v389 = vrot.slane %v291, 2
      %v390 = vrot.slane %v300, 2
      %v391 = vsel %vm367, %v389, %v390
      %392 = vrot.lane.b32.xlu0 %v370, 8
      %v393 = vpop.permute.xlu0 %392
      %394 = vrot.lane.b32.xlu0 %v373, 8
      %v395 = vpop.permute.xlu0 %394
      %396 = vrot.lane.b32.xlu0 %v376, 8
      %v397 = vpop.permute.xlu0 %396
      %398 = vrot.lane.b32.xlu0 %v379, 8
      %v399 = vpop.permute.xlu0 %398
      %400 = vrot.lane.b32.xlu0 %v382, 8
      %v401 = vpop.permute.xlu0 %400
      %402 = vrot.lane.b32.xlu0 %v385, 8
      %v403 = vpop.permute.xlu0 %402
      %404 = vrot.lane.b32.xlu0 %v388, 8
      %v405 = vpop.permute.xlu0 %404
      %406 = vrot.lane.b32.xlu0 %v391, 8
      %v407 = vpop.permute.xlu0 %406
      %417 = vrot.lane.b32.xlu0 %v285, 12
      %v418 = vpop.permute.xlu0 %417
      %419 = vrot.lane.b32.xlu0 %v286, 12
      %v420 = vpop.permute.xlu0 %419
      %421 = vrot.lane.b32.xlu0 %v287, 12
      %v422 = vpop.permute.xlu0 %421
      %423 = vrot.lane.b32.xlu0 %v288, 12
      %v424 = vpop.permute.xlu0 %423
      %425 = vrot.lane.b32.xlu0 %v289, 12
      %v426 = vpop.permute.xlu0 %425
      %427 = vrot.lane.b32.xlu0 %v290, 12
      %v428 = vpop.permute.xlu0 %427
      %429 = vrot.lane.b32.xlu0 %v291, 12
      %v430 = vpop.permute.xlu0 %429
      %431 = vrot.lane.b32.xlu0 %v292, 12
      %v432 = vpop.permute.xlu0 %431
      %v442 = vrot.slane %v292, 1
      %v443 = vrot.slane %v301, 1
      %v444 = vsel %vm318, %v442, %v443
      %445 = vrot.lane.b32.xlu0 %v324, 16
      %v446 = vpop.permute.xlu0 %445
      %447 = vrot.lane.b32.xlu0 %v327, 16
      %v448 = vpop.permute.xlu0 %447
      %449 = vrot.lane.b32.xlu0 %v330, 16
      %v450 = vpop.permute.xlu0 %449
      %451 = vrot.lane.b32.xlu0 %v333, 16
      %v452 = vpop.permute.xlu0 %451
      %453 = vrot.lane.b32.xlu0 %v336, 16
      %v454 = vpop.permute.xlu0 %453
      %455 = vrot.lane.b32.xlu0 %v339, 16
      %v456 = vpop.permute.xlu0 %455
      %457 = vrot.lane.b32.xlu0 %v342, 16
      %v458 = vpop.permute.xlu0 %457
      %459 = vrot.lane.b32.xlu0 %v444, 16
      %v460 = vpop.permute.xlu0 %459
      %v469 = vrot.slane %v292, 2
      %v470 = vrot.slane %v301, 2
      %v471 = vsel %vm367, %v469, %v470
      %472 = vrot.lane.b32.xlu0 %v373, 20
      %v473 = vpop.permute.xlu0 %472
      %474 = vrot.lane.b32.xlu0 %v376, 20
      %v475 = vpop.permute.xlu0 %474
      %476 = vrot.lane.b32.xlu0 %v379, 20
      %v477 = vpop.permute.xlu0 %476
      %478 = vrot.lane.b32.xlu0 %v382, 20
      %v479 = vpop.permute.xlu0 %478
      %480 = vrot.lane.b32.xlu0 %v385, 20
      %v481 = vpop.permute.xlu0 %480
      %482 = vrot.lane.b32.xlu0 %v388, 20
      %v483 = vpop.permute.xlu0 %482
      %484 = vrot.lane.b32.xlu0 %v391, 20
      %v485 = vpop.permute.xlu0 %484
      %486 = vrot.lane.b32.xlu0 %v471, 20
      %v487 = vpop.permute.xlu0 %486
      %496 = vrot.lane.b32.xlu0 %v286, 24
      %v497 = vpop.permute.xlu0 %496
      %498 = vrot.lane.b32.xlu0 %v287, 24
      %v499 = vpop.permute.xlu0 %498
      %500 = vrot.lane.b32.xlu0 %v288, 24
      %v501 = vpop.permute.xlu0 %500
      %502 = vrot.lane.b32.xlu0 %v289, 24
      %v503 = vpop.permute.xlu0 %502
      %504 = vrot.lane.b32.xlu0 %v290, 24
      %v505 = vpop.permute.xlu0 %504
      %506 = vrot.lane.b32.xlu0 %v291, 24
      %v507 = vpop.permute.xlu0 %506
      %508 = vrot.lane.b32.xlu0 %v292, 24
      %v509 = vpop.permute.xlu0 %508
      %510 = vrot.lane.b32.xlu0 %v284, 24
      %v511 = vpop.permute.xlu0 %510
      %520 = vrot.lane.b32.xlu0 %v327, 28
      %v521 = vpop.permute.xlu0 %520
      %522 = vrot.lane.b32.xlu0 %v330, 28
      %v523 = vpop.permute.xlu0 %522
      %524 = vrot.lane.b32.xlu0 %v333, 28
      %v525 = vpop.permute.xlu0 %524
      %526 = vrot.lane.b32.xlu0 %v336, 28
      %v527 = vpop.permute.xlu0 %526
      %528 = vrot.lane.b32.xlu0 %v339, 28
      %v529 = vpop.permute.xlu0 %528
      %530 = vrot.lane.b32.xlu0 %v342, 28
      %v531 = vpop.permute.xlu0 %530
      %532 = vrot.lane.b32.xlu0 %v444, 28
      %v533 = vpop.permute.xlu0 %532
      %534 = vrot.lane.b32.xlu0 %v321, 28
      %v535 = vpop.permute.xlu0 %534
      %544 = vrot.lane.b32.xlu0 %v376, 32
      %v545 = vpop.permute.xlu0 %544
      %546 = vrot.lane.b32.xlu0 %v379, 32
      %v547 = vpop.permute.xlu0 %546
      %548 = vrot.lane.b32.xlu0 %v382, 32
      %v549 = vpop.permute.xlu0 %548
      %550 = vrot.lane.b32.xlu0 %v385, 32
      %v551 = vpop.permute.xlu0 %550
      %552 = vrot.lane.b32.xlu0 %v388, 32
      %v553 = vpop.permute.xlu0 %552
      %554 = vrot.lane.b32.xlu0 %v391, 32
      %v555 = vpop.permute.xlu0 %554
      %556 = vrot.lane.b32.xlu0 %v471, 32
      %v557 = vpop.permute.xlu0 %556
      %558 = vrot.lane.b32.xlu0 %v370, 32
      %v559 = vpop.permute.xlu0 %558
      %vm568 = vcmask 31744
      %v569 = vsel %vm568, %v284, %v344
      %v570 = vsel %vm568, %v285, %v346
      %v571 = vsel %vm568, %v286, %v348
      %v572 = vsel %vm568, %v287, %v350
      %v573 = vsel %vm568, %v288, %v352
      %v574 = vsel %vm568, %v289, %v354
      %v575 = vsel %vm568, %v290, %v356
      %v576 = vsel %vm568, %v291, %v358
      %vm577 = vcmask 64512
      %v578 = vsel %vm577, %v569, %v393
      %v579 = vsel %vm577, %v570, %v395
      %v580 = vsel %vm577, %v571, %v397
      %v581 = vsel %vm577, %v572, %v399
      %v582 = vsel %vm577, %v573, %v401
      %v583 = vsel %vm577, %v574, %v403
      %v584 = vsel %vm577, %v575, %v405
      %v585 = vsel %vm577, %v576, %v407
      %vm586 = vcmask 97280
      %v587 = vsel %vm586, %v578, %v418
      %v588 = vsel %vm586, %v579, %v420
      %v589 = vsel %vm586, %v580, %v422
      %v590 = vsel %vm586, %v581, %v424
      %v591 = vsel %vm586, %v582, %v426
      %v592 = vsel %vm586, %v583, %v428
      %v593 = vsel %vm586, %v584, %v430
      %v594 = vsel %vm586, %v585, %v432
      %vm595 = vcmask 130048
      %v596 = vsel %vm595, %v587, %v446
      %v597 = vsel %vm595, %v588, %v448
      %v598 = vsel %vm595, %v589, %v450
      %v599 = vsel %vm595, %v590, %v452
      %v600 = vsel %vm595, %v591, %v454
      %v601 = vsel %vm595, %v592, %v456
      %v602 = vsel %vm595, %v593, %v458
      %v603 = vsel %vm595, %v594, %v460
      %vm604 = vcmask 162816
      %v605 = vsel %vm604, %v596, %v473
      %v606 = vsel %vm604, %v597, %v475
      %v607 = vsel %vm604, %v598, %v477
      %v608 = vsel %vm604, %v599, %v479
      %v609 = vsel %vm604, %v600, %v481
      %v610 = vsel %vm604, %v601, %v483
      %v611 = vsel %vm604, %v602, %v485
      %v612 = vsel %vm604, %v603, %v487
      %vm613 = vcmask 195584
      %v614 = vsel %vm613, %v605, %v497
      %v615 = vsel %vm613, %v606, %v499
      %v616 = vsel %vm613, %v607, %v501
      %v617 = vsel %vm613, %v608, %v503
      %v618 = vsel %vm613, %v609, %v505
      %v619 = vsel %vm613, %v610, %v507
      %v620 = vsel %vm613, %v611, %v509
      %v621 = vsel %vm613, %v612, %v511
      %vm622 = vcmask 228352
      %v623 = vsel %vm622, %v614, %v521
      %v624 = vsel %vm622, %v615, %v523
      %v625 = vsel %vm622, %v616, %v525
      %v626 = vsel %vm622, %v617, %v527
      %v627 = vsel %vm622, %v618, %v529
      %v628 = vsel %vm622, %v619, %v531
      %v629 = vsel %vm622, %v620, %v533
      %v630 = vsel %vm622, %v621, %v535
      %vm631 = vcmask 261120
      %v632 = vsel %vm631, %v623, %v545
      %v633 = vsel %vm631, %v624, %v547
      %v634 = vsel %vm631, %v625, %v549
      %v635 = vsel %vm631, %v626, %v551
      %v636 = vsel %vm631, %v627, %v553
      %v637 = vsel %vm631, %v628, %v555
      %v638 = vsel %vm631, %v629, %v557
      %v639 = vsel %vm631, %v630, %v559
      %vm640 = vcmask 293888
      %v642 = vsel %vm640, %v632, 0
      %v645 = vsel %vm640, %v633, 0
      %v648 = vsel %vm640, %v634, 0
      %v651 = vsel %vm640, %v635, 0
      %v654 = vsel %vm640, %v636, 0
      %v657 = vsel %vm640, %v637, 0
      %v660 = vsel %vm640, %v638, 0
      %v663 = vsel %vm640, %v639, 0
      %vm665 = vcmask 1043456
      %v667 = vsel %vm665, %v255, 0
      %669 = vmatpush.msra.mxu0 0.0
      %670 = vmatpush.msra.mxu0 0.0
      %671 = vmatpush.msra.mxu0 0.0
      %672 = vmatpush.msra.mxu0 0.0
      %673 = vmatpush.msra.mxu0 0.0
      %674 = vmatpush.msra.mxu0 0.0
      %675 = vmatpush.msra.mxu0 0.0
      %676 = vmatpush.msra.mxu0 0.0
      %677 = vmatpush.msra.mxu0 0.0
      %678 = vmatpush.msra.mxu0 0.0
      %679 = vmatpush.msra.mxu0 0.0
      %680 = vmatpush.msra.mxu0 %v667
      %681 = vmatpush.msra.mxu0 %v254
      %682 = vmatpush.msra.mxu0 %v253
      %683 = vmatpush.msra.mxu0 %v252
      %684 = vmatpush.msra.mxu0 %v251
      %685 = vmatmul.f32.gmra.mxu0 %v642
      %v686 = vpop.f32.mrf.mxu0
      %v687 = vadd.f32 0.0, %v686
      %688 = vmatmul.f32.gmra.mxu0 %v645
      %v689 = vpop.f32.mrf.mxu0
      %v690 = vadd.f32 0.0, %v689
      %691 = vmatmul.f32.gmra.mxu0 %v648
      %v692 = vpop.f32.mrf.mxu0
      %v693 = vadd.f32 0.0, %v692
      %694 = vmatmul.f32.gmra.mxu0 %v651
      %v695 = vpop.f32.mrf.mxu0
      %v696 = vadd.f32 0.0, %v695
      %697 = vmatmul.f32.gmra.mxu0 %v654
      %v698 = vpop.f32.mrf.mxu0
      %v699 = vadd.f32 0.0, %v698
      %700 = vmatmul.f32.gmra.mxu0 %v657
      %v701 = vpop.f32.mrf.mxu0
      %v702 = vadd.f32 0.0, %v701
      %703 = vmatmul.f32.gmra.mxu0 %v660
      %v704 = vpop.f32.mrf.mxu0
      %v705 = vadd.f32 0.0, %v704
      %706 = vmatmul.f32.gmra.mxu0 %v663
      %v707 = vpop.f32.mrf.mxu0
      %v708 = vadd.f32 0.0, %v707
      %709 = vdwg.mxu0
      %710 = vst.msk [vmem:[%s182] sm:$0xff] %vm577, %v687
      %711 = vst.msk [vmem:[%s182 + $0x8] sm:$0xff] %vm577, %v690
      %712 = vst.msk [vmem:[%s182 + $0x10] sm:$0xff] %vm577, %v693
      %713 = vst.msk [vmem:[%s182 + $0x18] sm:$0xff] %vm577, %v696
      %714 = vst.msk [vmem:[%s182 + $0x20] sm:$0xff] %vm577, %v699
      %715 = vst.msk [vmem:[%s182 + $0x28] sm:$0xff] %vm577, %v702
      %716 = vst.msk [vmem:[%s182 + $0x30] sm:$0xff] %vm577, %v705
      %717 = vst.msk [vmem:[%s182 + $0x38] sm:$0xff] %vm577, %v708
      %v718 = vsel %vm577, %v687, 0.0
      %v719 = vsel %vm577, %v690, 0.0
      %v720 = vadd.f32 %v718, %v719
      %v721 = vsel %vm577, %v693, 0.0
      %v722 = vadd.f32 %v720, %v721
      %v723 = vsel %vm577, %v696, 0.0
      %v724 = vadd.f32 %v722, %v723
      %v725 = vsel %vm577, %v699, 0.0
      %v726 = vadd.f32 %v724, %v725
      %v727 = vsel %vm577, %v702, 0.0
      %v728 = vadd.f32 %v726, %v727
      %v729 = vsel %vm577, %v705, 0.0
      %v730 = vadd.f32 %v728, %v729
      %v731 = vsel %vm577, %v708, 0.0
      %v732 = vadd.f32 %v730, %v731
      %v733 = vrot.slane %v732, 4
      %v734 = vadd.f32 %v732, %v733
      %v735 = vrot.slane %v734, 2
      %v736 = vadd.f32 %v734, %v735
      %v737 = vrot.slane %v736, 1
      %v738 = vadd.f32 %v736, %v737
      %v739 = vmul.f32 %v687, %v687
      %v740 = vmul.f32 %v690, %v690
      %v741 = vmul.f32 %v693, %v693
      %v742 = vmul.f32 %v696, %v696
      %v743 = vmul.f32 %v699, %v699
      %v744 = vmul.f32 %v702, %v702
      %v745 = vmul.f32 %v705, %v705
      %v746 = vmul.f32 %v708, %v708
      %v747 = vsel %vm577, %v739, 0.0
      %v748 = vsel %vm577, %v740, 0.0
      %v749 = vadd.f32 %v747, %v748
      %v750 = vsel %vm577, %v741, 0.0
      %v751 = vadd.f32 %v749, %v750
      %v752 = vsel %vm577, %v742, 0.0
      %v753 = vadd.f32 %v751, %v752
      %v754 = vsel %vm577, %v743, 0.0
      %v755 = vadd.f32 %v753, %v754
      %v756 = vsel %vm577, %v744, 0.0
      %v757 = vadd.f32 %v755, %v756
      %v758 = vsel %vm577, %v745, 0.0
      %v759 = vadd.f32 %v757, %v758
      %v760 = vsel %vm577, %v746, 0.0
      %v761 = vadd.f32 %v759, %v760
      %v762 = vrot.slane %v761, 4
      %v763 = vadd.f32 %v761, %v762
      %v764 = vrot.slane %v763, 2
      %v765 = vadd.f32 %v763, %v764
      %v766 = vrot.slane %v765, 1
      %v767 = vadd.f32 %v765, %v766
      %v768 = vsel %vm283, %v738, %v767
      %vm769 = vcmask 58368
      %770 = vst.msk [vmem:[%s186] sm:$0x3] %vm769, %v768
      %p771 = scmp.lt.s32.totalorder %s15, 1
      %s772 = scalar_select %p771, %s15, 1
      %s773 = smul.addr %s772, 8
      %s774 = smul.addr %s773, 8
      %s775 = scalar_lea.vmem %s2, %s774
      %p776 = scmp.lt.s32.totalorder %s15, 1
      %s777 = scalar_select %p776, %s15, 1
      %s778 = smul.addr %s777, 2
      %s779 = scalar_lea.vmem %s3, %s778
      // Predicated region
      $region29: #{down_forward.3} parent=27 // pred_check
        %p780 = pneg %p80
      $region30: #{down_forward.3} parent=27 // pred_check_branch
        %782 = sbr.rel (%p780) target = $region32
      $region31: #{down_forward.3} parent=27 // pred_region
        _
      $region32: #{down_forward.3} parent=27 // pred_fallthru
        _
      // Predicated region
      $region33: #{down_forward.3} parent=27 // pred_check
        %p783 = pneg %p106
      $region34: #{down_forward.3} parent=27 // pred_check_branch
        %785 = sbr.rel (%p783) target = $region36
      $region35: #{down_forward.3} parent=27 // pred_region
        _
      $region36: #{down_forward.3} parent=27 // pred_fallthru
        _
    $region28: #{down_forward.3} parent=5 // pred_fallthru
      _
    %p786 = scmp.le.s32.totalorder 2, %s10
    // Predicated region
    $region37: #{down_forward.3} parent=5 // pred_check
      %p787 = pneg %p786
    $region38: #{down_forward.3} parent=5 // pred_check_branch
      %789 = sbr.rel (%p787) target = $region40
    $region39: #{down_forward.3} parent=5 // pred_region
      %s790 = ssub.s32 %s10, 2
      // Predicated region
      $region41: #{down_forward.3} parent=39 // pred_check
        %p791 = pneg %p86
      $region42: #{down_forward.3} parent=39 // pred_check_branch
        %793 = sbr.rel (%p791) target = $region44
      $region43: #{down_forward.3} parent=39 // pred_region
        %p794 = scmp.lt.s32.totalorder %s16, 1
        %s795 = scalar_select %p794, %s16, 1
        %s796 = smul.addr %s795, 8
        %s797 = smul.addr %s796, 8
        %s798 = scalar_lea.vmem %s2, %s797
      $region44: #{down_forward.3} parent=39 // pred_fallthru
        _
      // Predicated region
      $region45: #{down_forward.3} parent=39 // pred_check
        %p799 = pneg %p112
      $region46: #{down_forward.3} parent=39 // pred_check_branch
        %801 = sbr.rel (%p799) target = $region48
      $region47: #{down_forward.3} parent=39 // pred_region
        %p802 = scmp.lt.s32.totalorder %s16, 1
        %s803 = scalar_select %p802, %s16, 1
        %s804 = smul.addr %s803, 2
        %s805 = scalar_lea.vmem %s3, %s804
      $region48: #{down_forward.3} parent=39 // pred_fallthru
        _
    $region40: #{down_forward.3} parent=5 // pred_fallthru
      _
  $region6: #{down_forward.3} parent=0 // loop_footer
    %s14 = sadd.s32 1, %s10
  $region7: #{down_forward.3} parent=0 // loop_footer_branch
    %9 = sbr.rel target = $region3
  $region8: #{down_forward.3} parent=0 // loop_exit
    _

// kernel: down_forward.4
$region0: #{down_forward.4}
  #allocation0 [shape = 'u32[]', space=smem, size = 0x4, offset = 0x4, fixed_abs, tag = 'smem constant byte address 0x4 - core index']
  #allocation1 [shape = 'u32[72,128]{1,0:T(1,128)}', space=vmem, size = 0x9000, scoped, tag = 'internal scratch']
  %s0 = inlined_call_operand.vmem [shape: f32[2,8,8,8], index: 0, kind: input, shape index: {}]
  %s1 = inlined_call_operand.vmem [shape: f32[1,8], index: 1, kind: input, shape index: {}]
  %s2 = inlined_call_operand.vmem [shape: f32[1,8], index: 2, kind: input, shape index: {}]
  %s3 = inlined_call_operand.vmem [shape: f32[72,8], index: 3, kind: input, shape index: {}]
  %s4 = inlined_call_operand.vmem [shape: f32[2,8,8,8], index: 4, kind: output, shape index: {0}]
  %s5 = inlined_call_operand.vmem [shape: f32[2,2,8], index: 5, kind: output, shape index: {1}]
  %6 = xla_tuple %s4, %s5
  %s7 = sld [smem:[#allocation0]]
  $region57: #{down_forward.4} parent=0
    _
  %s9 = ssub.s32 1, %s7
  %s10 = scalar_select 0, %s9, %s7
  loop: start=0, step=1, limit=4
  $region2: #{down_forward.4} parent=0 // loop_pre_header
    _
  $region3: #{down_forward.4} parent=0 // loop_header
    %s12 = sphi 0, %s16
    %p13 = scmp.ge.s32.totalorder %s12, 4
    %s22 = sphi 0, %s24
    %s25 = sphi 0, %s22
    %s26 = sphi 0, %s25
    %s42 = sphi 0, %s26
    %s46 = sphi 0, %s46
    %s48 = sphi 0, %s46
    %s49 = sphi 0, %s48
    %s63 = sphi 0, %s49
    %s67 = sphi 0, %s67
    %s69 = sphi 0, %s67
    %s70 = sphi 0, %s69
    %s84 = sphi 0, %s70
    %s88 = sphi 0, %s88
    %s90 = sphi 0, %s88
    %s91 = sphi 0, %s90
    %s105 = sphi 0, %s91
    %s111 = sphi 0, %s113
    %s114 = sphi 0, %s111
    %s115 = sphi 0, %s114
    %s131 = sphi 0, %s115
    %s137 = sphi 0, %s139
    %s140 = sphi 0, %s137
    %s141 = sphi 0, %s140
    %s157 = sphi 0, %s141
  $region4: #{down_forward.4} parent=0 // loop_header_branch
    %15 = sbr.rel (%p13) target = $region8
  $region5: #{down_forward.4} parent=0 // loop_body
    %s17 = ssub.s32 %s12, 1
    %s18 = ssub.s32 %s12, 2
    %s19 = sadd.s32 %s12, 1
    %s20 = ssub.s32 %s12, %s19
    %p21 = scmp.eq.s32.totalorder %s20, 0
    %s23 = sadd.s32 %s22, 1
    %s24 = scalar_select %p21, %s22, %s23
    %p27 = pneg %p21
    %p28 = scmp.eq.s32.totalorder %s12, 1
    %p29 = por %p27, %p28
    %p30 = scmp.ne.s32.totalorder %s22, %s25
    %p31 = scmp.eq.s32.totalorder %s12, 0
    %p32 = por %p30, %p31
    %p33 = scmp.ne.s32.totalorder %s22, %s25
    %p34 = scmp.eq.s32.totalorder %s17, 1
    %p35 = por %p33, %p34
    %p36 = scmp.ne.s32.totalorder %s25, %s26
    %p37 = scmp.eq.s32.totalorder %s17, 0
    %p38 = por %p36, %p37
    %p39 = scmp.ne.s32.totalorder %s25, %s26
    %p40 = scmp.eq.s32.totalorder %s18, 1
    %p41 = por %p39, %p40
    %p43 = scmp.ne.s32.totalorder %s26, %s42
    %p44 = scmp.eq.s32.totalorder %s18, 0
    %p45 = por %p43, %p44
    %s47 = sadd.s32 %s46, 1
    %p50 = scmp.eq.s32.totalorder %s12, 1
    %p51 = scmp.ne.s32.totalorder %s46, %s48
    %p52 = scmp.eq.s32.totalorder %s12, 0
    %p53 = por %p51, %p52
    %p54 = scmp.ne.s32.totalorder %s46, %s48
    %p55 = scmp.eq.s32.totalorder %s17, 1
    %p56 = por %p54, %p55
    %p57 = scmp.ne.s32.totalorder %s48, %s49
    %p58 = scmp.eq.s32.totalorder %s17, 0
    %p59 = por %p57, %p58
    %p60 = scmp.ne.s32.totalorder %s48, %s49
    %p61 = scmp.eq.s32.totalorder %s18, 1
    %p62 = por %p60, %p61
    %p64 = scmp.ne.s32.totalorder %s49, %s63
    %p65 = scmp.eq.s32.totalorder %s18, 0
    %p66 = por %p64, %p65
    %s68 = sadd.s32 %s67, 1
    %p71 = scmp.eq.s32.totalorder %s12, 1
    %p72 = scmp.ne.s32.totalorder %s67, %s69
    %p73 = scmp.eq.s32.totalorder %s12, 0
    %p74 = por %p72, %p73
    %p75 = scmp.ne.s32.totalorder %s67, %s69
    %p76 = scmp.eq.s32.totalorder %s17, 1
    %p77 = por %p75, %p76
    %p78 = scmp.ne.s32.totalorder %s69, %s70
    %p79 = scmp.eq.s32.totalorder %s17, 0
    %p80 = por %p78, %p79
    %p81 = scmp.ne.s32.totalorder %s69, %s70
    %p82 = scmp.eq.s32.totalorder %s18, 1
    %p83 = por %p81, %p82
    %p85 = scmp.ne.s32.totalorder %s70, %s84
    %p86 = scmp.eq.s32.totalorder %s18, 0
    %p87 = por %p85, %p86
    %s89 = sadd.s32 %s88, 1
    %p92 = scmp.eq.s32.totalorder %s12, 1
    %p93 = scmp.ne.s32.totalorder %s88, %s90
    %p94 = scmp.eq.s32.totalorder %s12, 0
    %p95 = por %p93, %p94
    %p96 = scmp.ne.s32.totalorder %s88, %s90
    %p97 = scmp.eq.s32.totalorder %s17, 1
    %p98 = por %p96, %p97
    %p99 = scmp.ne.s32.totalorder %s90, %s91
    %p100 = scmp.eq.s32.totalorder %s17, 0
    %p101 = por %p99, %p100
    %p102 = scmp.ne.s32.totalorder %s90, %s91
    %p103 = scmp.eq.s32.totalorder %s18, 1
    %p104 = por %p102, %p103
    %p106 = scmp.ne.s32.totalorder %s91, %s105
    %p107 = scmp.eq.s32.totalorder %s18, 0
    %p108 = por %p106, %p107
    %s109 = ssub.s32 %s12, %s19
    %p110 = scmp.eq.s32.totalorder %s109, 0
    %s112 = sadd.s32 %s111, 1
    %s113 = scalar_select %p110, %s111, %s112
    %p116 = pneg %p110
    %p117 = scmp.eq.s32.totalorder %s12, 1
    %p118 = por %p116, %p117
    %p119 = scmp.ne.s32.totalorder %s111, %s114
    %p120 = scmp.eq.s32.totalorder %s12, 0
    %p121 = por %p119, %p120
    %p122 = scmp.ne.s32.totalorder %s111, %s114
    %p123 = scmp.eq.s32.totalorder %s17, 1
    %p124 = por %p122, %p123
    %p125 = scmp.ne.s32.totalorder %s114, %s115
    %p126 = scmp.eq.s32.totalorder %s17, 0
    %p127 = por %p125, %p126
    %p128 = scmp.ne.s32.totalorder %s114, %s115
    %p129 = scmp.eq.s32.totalorder %s18, 1
    %p130 = por %p128, %p129
    %p132 = scmp.ne.s32.totalorder %s115, %s131
    %p133 = scmp.eq.s32.totalorder %s18, 0
    %p134 = por %p132, %p133
    %s135 = ssub.s32 %s12, %s19
    %p136 = scmp.eq.s32.totalorder %s135, 0
    %s138 = sadd.s32 %s137, 1
    %s139 = scalar_select %p136, %s137, %s138
    %p142 = pneg %p136
    %p143 = scmp.eq.s32.totalorder %s12, 1
    %p144 = por %p142, %p143
    %p145 = scmp.ne.s32.totalorder %s137, %s140
    %p146 = scmp.eq.s32.totalorder %s12, 0
    %p147 = por %p145, %p146
    %p148 = scmp.ne.s32.totalorder %s137, %s140
    %p149 = scmp.eq.s32.totalorder %s17, 1
    %p150 = por %p148, %p149
    %p151 = scmp.ne.s32.totalorder %s140, %s141
    %p152 = scmp.eq.s32.totalorder %s17, 0
    %p153 = por %p151, %p152
    %p154 = scmp.ne.s32.totalorder %s140, %s141
    %p155 = scmp.eq.s32.totalorder %s18, 1
    %p156 = por %p154, %p155
    %p158 = scmp.ne.s32.totalorder %s141, %s157
    %p159 = scmp.eq.s32.totalorder %s18, 0
    %p160 = por %p158, %p159
    %p161 = scmp.le.s32.totalorder 1, %s12
    %p162 = scmp.lt.s32.totalorder %s12, 3
    %p163 = pnand %p161, %p162
    %p164 = pneg %p163
    // Predicated region
    $region9: #{down_forward.4} parent=5 // pred_check
      _
    $region10: #{down_forward.4} parent=5 // pred_check_branch
      %166 = sbr.rel (%p163) target = $region12
    $region11: #{down_forward.4} parent=5 // pred_region
      %s167 = ssub.s32 %s12, 1
      // Predicated region
      $region13: #{down_forward.4} parent=11 // pred_check
        %p168 = pneg %p59
      $region14: #{down_forward.4} parent=11 // pred_check_branch
        %170 = sbr.rel (%p168) target = $region16
      $region15: #{down_forward.4} parent=11 // pred_region
        _
      $region16: #{down_forward.4} parent=11 // pred_fallthru
        _
      // Predicated region
      $region17: #{down_forward.4} parent=11 // pred_check
        %p171 = pneg %p80
      $region18: #{down_forward.4} parent=11 // pred_check_branch
        %173 = sbr.rel (%p171) target = $region20
      $region19: #{down_forward.4} parent=11 // pred_region
        _
      $region20: #{down_forward.4} parent=11 // pred_fallthru
        _
      // Predicated region
      $region21: #{down_forward.4} parent=11 // pred_check
        %p174 = pneg %p101
      $region22: #{down_forward.4} parent=11 // pred_check_branch
        %176 = sbr.rel (%p174) target = $region24
      $region23: #{down_forward.4} parent=11 // pred_region
        _
      $region24: #{down_forward.4} parent=11 // pred_fallthru
        _
    $region12: #{down_forward.4} parent=5 // pred_fallthru
      _
    %p177 = scmp.lt.s32.totalorder %s12, 2
    // Predicated region
    $region25: #{down_forward.4} parent=5 // pred_check
      %p178 = pneg %p177
    $region26: #{down_forward.4} parent=5 // pred_check_branch
      %180 = sbr.rel (%p178) target = $region28
    $region27: #{down_forward.4} parent=5 // pred_region
      // Predicated region
      $region29: #{down_forward.4} parent=27 // pred_check
        %p181 = pneg %p32
      $region30: #{down_forward.4} parent=27 // pred_check_branch
        %183 = sbr.rel (%p181) target = $region32
      $region31: #{down_forward.4} parent=27 // pred_region
        %p184 = scmp.lt.s32.totalorder %s12, 1
        %s185 = scalar_select %p184, %s12, 1
        %s186 = smul.addr %s185, 8
        %s187 = smul.addr %s186, 8
        %s188 = scalar_lea.vmem %s0, %s187
      $region32: #{down_forward.4} parent=27 // pred_fallthru
        _
    $region28: #{down_forward.4} parent=5 // pred_fallthru
      _
    %p189 = scmp.le.s32.totalorder 1, %s12
    %p190 = scmp.lt.s32.totalorder %s12, 3
    %p191 = pnand %p189, %p190
    %p192 = pneg %p191
    // Predicated region
    $region33: #{down_forward.4} parent=5 // pred_check
      _
    $region34: #{down_forward.4} parent=5 // pred_check_branch
      %194 = sbr.rel (%p191) target = $region36
    $region35: #{down_forward.4} parent=5 // pred_region
      %s195 = ssub.s32 %s12, 1
      %p196 = scmp.lt.s32.totalorder %s17, 1
      %s197 = scalar_select %p196, %s17, 1
      %s198 = smul.addr %s197, 8
      %s199 = smul.addr %s198, 8
      %s200 = scalar_lea.vmem %s0, %s199
      %p201 = pneg %p38
      %p202 = pneg %p35
      %p203 = pneg %p59
      %p204 = pneg %p56
      %p205 = pneg %p80
      %p206 = pneg %p77
      %p207 = pneg %p101
      %p208 = pneg %p98
      %p209 = pneg %p127
      %p210 = pneg %p124
      %p211 = scmp.lt.s32.totalorder %s17, 1
      %s212 = scalar_select %p211, %s17, 1
      %s213 = smul.addr %s212, 8
      %s214 = smul.addr %s213, 8
      %s215 = scalar_lea.vmem %s4, %s214
      %p216 = pneg %p153
      %p217 = pneg %p150
      %p218 = scmp.lt.s32.totalorder %s17, 1
      %s219 = scalar_select %p218, %s17, 1
      %s220 = smul.addr %s219, 2
      %s221 = scalar_lea.vmem %s5, %s220
      %p222 = scmp.lt.s32.totalorder %s17, 1
      %s223 = scalar_select %p222, %s17, 1
      %s224 = smul.addr %s223, 8
      %s225 = smul.addr %s224, 8
      %s226 = scalar_lea.vmem %s0, %s225
      %p227 = scmp.lt.s32.totalorder %s17, 1
      %s228 = scalar_select %p227, %s17, 1
      %s229 = smul.addr %s228, 8
      %s230 = smul.addr %s229, 8
      %s231 = scalar_lea.vmem %s4, %s230
      %p232 = scmp.lt.s32.totalorder %s17, 1
      %s233 = scalar_select %p232, %s17, 1
      %s234 = smul.addr %s233, 2
      %s235 = scalar_lea.vmem %s5, %s234
      %v236 = vld [vmem:[%s226] sm:$0xff]
      %v237 = vld [vmem:[%s226 + $0x8] sm:$0xff]
      %v238 = vld [vmem:[%s226 + $0x10] sm:$0xff]
      %v239 = vld [vmem:[%s226 + $0x18] sm:$0xff]
      %v240 = vld [vmem:[%s226 + $0x20] sm:$0xff]
      %v241 = vld [vmem:[%s226 + $0x28] sm:$0xff]
      %v242 = vld [vmem:[%s226 + $0x30] sm:$0xff]
      %v243 = vld [vmem:[%s226 + $0x38] sm:$0xff]
      %v244 = vld [vmem:[%s1] sm:$0x1]
      %v245 = vld [vmem:[%s2] sm:$0x1]
      %v247 = vperm.slane %v244, 0
      %v249 = vmul.f32 %v236, %v247
      %v250 = vmul.f32 %v237, %v247
      %v251 = vmul.f32 %v238, %v247
      %v252 = vmul.f32 %v239, %v247
      %v253 = vmul.f32 %v240, %v247
      %v254 = vmul.f32 %v241, %v247
      %v255 = vmul.f32 %v242, %v247
      %v256 = vmul.f32 %v243, %v247
      %v258 = vperm.slane %v245, 0
      %v260 = vadd.f32 %v249, %v258
      %v261 = vadd.f32 %v250, %v258
      %v262 = vadd.f32 %v251, %v258
      %v263 = vadd.f32 %v252, %v258
      %v264 = vadd.f32 %v253, %v258
      %v265 = vadd.f32 %v254, %v258
      %v266 = vadd.f32 %v255, %v258
      %v267 = vadd.f32 %v256, %v258
      %vm268 = vcmp.ge.f32.partialorder %v260, 0.0
      %vm269 = vcmp.ge.f32.partialorder %v261, 0.0
      %vm270 = vcmp.ge.f32.partialorder %v262, 0.0
      %vm271 = vcmp.ge.f32.partialorder %v263, 0.0
      %vm272 = vcmp.ge.f32.partialorder %v264, 0.0
      %vm273 = vcmp.ge.f32.partialorder %v265, 0.0
      %vm274 = vcmp.ge.f32.partialorder %v266, 0.0
      %vm275 = vcmp.ge.f32.partialorder %v267, 0.0
      %v276 = vmul.f32 %v260, 0.2
      %v277 = vmul.f32 %v261, 0.2
      %v278 = vmul.f32 %v262, 0.2
      %v279 = vmul.f32 %v263, 0.2
      %v280 = vmul.f32 %v264, 0.2
      %v281 = vmul.f32 %v265, 0.2
      %v282 = vmul.f32 %v266, 0.2
      %v283 = vmul.f32 %v267, 0.2
      %v284 = vsel %vm268, %v260, %v276
      %v285 = vsel %vm269, %v261, %v277
      %v286 = vsel %vm270, %v262, %v278
      %v287 = vsel %vm271, %v263, %v279
      %v288 = vsel %vm272, %v264, %v280
      %v289 = vsel %vm273, %v265, %v281
      %v290 = vsel %vm274, %v266, %v282
      %v291 = vsel %vm275, %v267, %v283
      %v292 = vld [vmem:[%s3] sm:$0xff]
      %v293 = vld [vmem:[%s3 + $0x8] sm:$0xff]
      %v294 = vld [vmem:[%s3 + $0x10] sm:$0xff]
      %v295 = vld [vmem:[%s3 + $0x18] sm:$0xff]
      %v296 = vld [vmem:[%s3 + $0x20] sm:$0xff]
      %v297 = vld [vmem:[%s3 + $0x28] sm:$0xff]
      %v298 = vld [vmem:[%s3 + $0x30] sm:$0xff]
      %v299 = vld [vmem:[%s3 + $0x38] sm:$0xff]
      %v300 = vld [vmem:[%s3 + $0x40] sm:$0xff]
      %v310 = vrot.slane 0.0, 7
      %v311 = vrot.slane %v284, 7
      %v312 = vrot.slane %v285, 7
      %v313 = vrot.slane %v286, 7
      %v314 = vrot.slane %v287, 7
      %v315 = vrot.slane %v288, 7
      %v316 = vrot.slane %v289, 7
      %v317 = vrot.slane %v290, 7
      %v318 = vrot.slane %v291, 7
      %vm328 = vcmask 1040384
      %v329 = vsel %vm328, 0.0, %v310
      %v330 = vsel %vm328, 0.0, %v311
      %v331 = vsel %vm328, 0.0, %v312
      %v332 = vsel %vm328, 0.0, %v313
      %v333 = vsel %vm328, 0.0, %v314
      %v334 = vsel %vm328, 0.0, %v315
      %v335 = vsel %vm328, 0.0, %v316
      %v336 = vsel %vm328, 0.0, %v317
      %v337 = vsel %vm328, 0.0, %v318
      %v338 = vsel %vm328, %v310, 0.0
      %v339 = vsel %vm328, %v311, 0.0
      %v340 = vsel %vm328, %v312, 0.0
      %v341 = vsel %vm328, %v313, 0.0
      %v342 = vsel %vm328, %v314, 0.0
      %v343 = vsel %vm328, %v315, 0.0
      %v344 = vsel %vm328, %v316, 0.0
      %v345 = vsel %vm328, %v317, 0.0
      %v346 = vsel %vm328, %v318, 0.0
      %vm363 = vcmask 1046528
      %v364 = vrot.slane %v329, 1
      %v365 = vrot.slane %v338, 1
      %v366 = vsel %vm363, %v364, %v365
      %v367 = vrot.slane %v330, 1
      %v368 = vrot.slane %v339, 1
      %v369 = vsel %vm363, %v367, %v368
      %v370 = vrot.slane %v331, 1
      %v371 = vrot.slane %v340, 1
      %v372 = vsel %vm363, %v370, %v371
      %v373 = vrot.slane %v332, 1
      %v374 = vrot.slane %v341, 1
      %v375 = vsel %vm363, %v373, %v374
      %v376 = vrot.slane %v333, 1
      %v377 = vrot.slane %v342, 1
      %v378 = vsel %vm363, %v376, %v377
      %v379 = vrot.slane %v334, 1
      %v380 = vrot.slane %v343, 1
      %v381 = vsel %vm363, %v379, %v380
      %v382 = vrot.slane %v335, 1
      %v383 = vrot.slane %v344, 1
      %v384 = vsel %vm363, %v382, %v383
      %v385 = vrot.slane %v336, 1
      %v386 = vrot.slane %v345, 1
      %v387 = vsel %vm363, %v385, %v386
      %388 = vrot.lane.b32.xlu0 %v366, 8
      %v389 = vpop.permute.xlu0 %388
      %390 = vrot.lane.b32.xlu0 %v369, 8
      %v391 = vpop.permute.xlu0 %390
      %392 = vrot.lane.b32.xlu0 %v372, 8
      %v393 = vpop.permute.xlu0 %392
      %394 = vrot.lane.b32.xlu0 %v375, 8
      %v395 = vpop.permute.xlu0 %394
      %396 = vrot.lane.b32.xlu0 %v378, 8
      %v397 = vpop.permute.xlu0 %396
      %398 = vrot.lane.b32.xlu0 %v381, 8
      %v399 = vpop.permute.xlu0 %398
      %400 = vrot.lane.b32.xlu0 %v384, 8
      %v401 = vpop.permute.xlu0 %400
      %402 = vrot.lane.b32.xlu0 %v387, 8
      %v403 = vpop.permute.xlu0 %402
      %vm412 = vcmask 1045504
      %v413 = vrot.slane %v329, 2
      %v414 = vrot.slane %v338, 2
      %v415 = vsel %vm412, %v413, %v414
      %v416 = vrot.slane %v330, 2
      %v417 = vrot.slane %v339, 2
      %v418 = vsel %vm412, %v416, %v417
      %v419 = vrot.slane %v331, 2
      %v420 = vrot.slane %v340, 2
      %v421 = vsel %vm412, %v419, %v420
      %v422 = vrot.slane %v332, 2
      %v423 = vrot.slane %v341, 2
      %v424 = vsel %vm412, %v422, %v423
      %v425 = vrot.slane %v333, 2
      %v426 = vrot.slane %v342, 2
      %v427 = vsel %vm412, %v425, %v426
      %v428 = vrot.slane %v334, 2
      %v429 = vrot.slane %v343, 2
      %v430 = vsel %vm412, %v428, %v429
      %v431 = vrot.slane %v335, 2
      %v432 = vrot.slane %v344, 2
      %v433 = vsel %vm412, %v431, %v432
      %v434 = vrot.slane %v336, 2
      %v435 = vrot.slane %v345, 2
      %v436 = vsel %vm412, %v434, %v435
      %437 = vrot.lane.b32.xlu0 %v415, 16
      %v438 = vpop.permute.xlu0 %437
      %439 = vrot.lane.b32.xlu0 %v418, 16
      %v440 = vpop.permute.xlu0 %439
      %441 = vrot.lane.b32.xlu0 %v421, 16
      %v442 = vpop.permute.xlu0 %441
      %443 = vrot.lane.b32.xlu0 %v424, 16
      %v444 = vpop.permute.xlu0 %443
      %445 = vrot.lane.b32.xlu0 %v427, 16
      %v446 = vpop.permute.xlu0 %445
      %447 = vrot.lane.b32.xlu0 %v430, 16
      %v448 = vpop.permute.xlu0 %447
      %449 = vrot.lane.b32.xlu0 %v433, 16
      %v450 = vpop.permute.xlu0 %449
      %451 = vrot.lane.b32.xlu0 %v436, 16
      %v452 = vpop.permute.xlu0 %451
      %462 = vrot.lane.b32.xlu0 %v330, 24
      %v463 = vpop.permute.xlu0 %462
      %464 = vrot.lane.b32.xlu0 %v331, 24
      %v465 = vpop.permute.xlu0 %464
      %466 = vrot.lane.b32.xlu0 %v332, 24
      %v467 = vpop.permute.xlu0 %466
      %468 = vrot.lane.b32.xlu0 %v333, 24
      %v469 = vpop.permute.xlu0 %468
      %470 = vrot.lane.b32.xlu0 %v334, 24
      %v471 = vpop.permute.xlu0 %470
      %472 = vrot.lane.b32.xlu0 %v335, 24
      %v473 = vpop.permute.xlu0 %472
      %474 = vrot.lane.b32.xlu0 %v336, 24
      %v475 = vpop.permute.xlu0 %474
      %476 = vrot.lane.b32.xlu0 %v337, 24
      %v477 = vpop.permute.xlu0 %476
      %v487 = vrot.slane %v337, 1
      %v488 = vrot.slane %v346, 1
      %v489 = vsel %vm363, %v487, %v488
      %490 = vrot.lane.b32.xlu0 %v369, 32
      %v491 = vpop.permute.xlu0 %490
      %492 = vrot.lane.b32.xlu0 %v372, 32
      %v493 = vpop.permute.xlu0 %492
      %494 = vrot.lane.b32.xlu0 %v375, 32
      %v495 = vpop.permute.xlu0 %494
      %496 = vrot.lane.b32.xlu0 %v378, 32
      %v497 = vpop.permute.xlu0 %496
      %498 = vrot.lane.b32.xlu0 %v381, 32
      %v499 = vpop.permute.xlu0 %498
      %500 = vrot.lane.b32.xlu0 %v384, 32
      %v501 = vpop.permute.xlu0 %500
      %502 = vrot.lane.b32.xlu0 %v387, 32
      %v503 = vpop.permute.xlu0 %502
      %504 = vrot.lane.b32.xlu0 %v489, 32
      %v505 = vpop.permute.xlu0 %504
      %v514 = vrot.slane %v337, 2
      %v515 = vrot.slane %v346, 2
      %v516 = vsel %vm412, %v514, %v515
      %517 = vrot.lane.b32.xlu0 %v418, 40
      %v518 = vpop.permute.xlu0 %517
      %519 = vrot.lane.b32.xlu0 %v421, 40
      %v520 = vpop.permute.xlu0 %519
      %521 = vrot.lane.b32.xlu0 %v424, 40
      %v522 = vpop.permute.xlu0 %521
      %523 = vrot.lane.b32.xlu0 %v427, 40
      %v524 = vpop.permute.xlu0 %523
      %525 = vrot.lane.b32.xlu0 %v430, 40
      %v526 = vpop.permute.xlu0 %525
      %527 = vrot.lane.b32.xlu0 %v433, 40
      %v528 = vpop.permute.xlu0 %527
      %529 = vrot.lane.b32.xlu0 %v436, 40
      %v530 = vpop.permute.xlu0 %529
      %531 = vrot.lane.b32.xlu0 %v516, 40
      %v532 = vpop.permute.xlu0 %531
      %541 = vrot.lane.b32.xlu0 %v331, 48
      %v542 = vpop.permute.xlu0 %541
      %543 = vrot.lane.b32.xlu0 %v332, 48
      %v544 = vpop.permute.xlu0 %543
      %545 = vrot.lane.b32.xlu0 %v333, 48
      %v546 = vpop.permute.xlu0 %545
      %547 = vrot.lane.b32.xlu0 %v334, 48
      %v548 = vpop.permute.xlu0 %547
      %549 = vrot.lane.b32.xlu0 %v335, 48
      %v550 = vpop.permute.xlu0 %549
      %551 = vrot.lane.b32.xlu0 %v336, 48
      %v552 = vpop.permute.xlu0 %551
      %553 = vrot.lane.b32.xlu0 %v337, 48
      %v554 = vpop.permute.xlu0 %553
      %555 = vrot.lane.b32.xlu0 %v329, 48
      %v556 = vpop.permute.xlu0 %555
      %565 = vrot.lane.b32.xlu0 %v372, 56
      %v566 = vpop.permute.xlu0 %565
      %567 = vrot.lane.b32.xlu0 %v375, 56
      %v568 = vpop.permute.xlu0 %567
      %569 = vrot.lane.b32.xlu0 %v378, 56
      %v570 = vpop.permute.xlu0 %569
      %571 = vrot.lane.b32.xlu0 %v381, 56
      %v572 = vpop.permute.xlu0 %571
      %573 = vrot.lane.b32.xlu0 %v384, 56
      %v574 = vpop.permute.xlu0 %573
      %575 = vrot.lane.b32.xlu0 %v387, 56
      %v576 = vpop.permute.xlu0 %575
      %577 = vrot.lane.b32.xlu0 %v489, 56
      %v578 = vpop.permute.xlu0 %577
      %579 = vrot.lane.b32.xlu0 %v366, 56
      %v580 = vpop.permute.xlu0 %579
      %589 = vrot.lane.b32.xlu0 %v421, 64
      %v590 = vpop.permute.xlu0 %589
      %591 = vrot.lane.b32.xlu0 %v424, 64
      %v592 = vpop.permute.xlu0 %591
      %593 = vrot.lane.b32.xlu0 %v427, 64
      %v594 = vpop.permute.xlu0 %593
      %595 = vrot.lane.b32.xlu0 %v430, 64
      %v596 = vpop.permute.xlu0 %595
      %597 = vrot.lane.b32.xlu0 %v433, 64
      %v598 = vpop.permute.xlu0 %597
      %599 = vrot.lane.b32.xlu0 %v436, 64
      %v600 = vpop.permute.xlu0 %599
      %601 = vrot.lane.b32.xlu0 %v516, 64
      %v602 = vpop.permute.xlu0 %601
      %603 = vrot.lane.b32.xlu0 %v415, 64
      %v604 = vpop.permute.xlu0 %603
      %vm613 = vcmask 64512
      %v614 = vsel %vm613, %v329, %v389
      %v615 = vsel %vm613, %v330, %v391
      %v616 = vsel %vm613, %v331, %v393
      %v617 = vsel %vm613, %v332, %v395
      %v618 = vsel %vm613, %v333, %v397
      %v619 = vsel %vm613, %v334, %v399
      %v620 = vsel %vm613, %v335, %v401
      %v621 = vsel %vm613, %v336, %v403
      %vm622 = vcmask 130048
      %v623 = vsel %vm622, %v614, %v438
      %v624 = vsel %vm622, %v615, %v440
      %v625 = vsel %vm622, %v616, %v442
      %v626 = vsel %vm622, %v617, %v444
      %v627 = vsel %vm622, %v618, %v446
      %v628 = vsel %vm622, %v619, %v448
      %v629 = vsel %vm622, %v620, %v450
      %v630 = vsel %vm622, %v621, %v452
      %vm631 = vcmask 195584
      %v632 = vsel %vm631, %v623, %v463
      %v633 = vsel %vm631, %v624, %v465
      %v634 = vsel %vm631, %v625, %v467
      %v635 = vsel %vm631, %v626, %v469
      %v636 = vsel %vm631, %v627, %v471
      %v637 = vsel %vm631, %v628, %v473
      %v638 = vsel %vm631, %v629, %v475
      %v639 = vsel %vm631, %v630, %v477
      %vm640 = vcmask 261120
      %v641 = vsel %vm640, %v632, %v491
      %v642 = vsel %vm640, %v633, %v493
      %v643 = vsel %vm640, %v634, %v495
      %v644 = vsel %vm640, %v635, %v497
      %v645 = vsel %vm640, %v636, %v499
      %v646 = vsel %vm640, %v637, %v501
      %v647 = vsel %vm640, %v638, %v503
      %v648 = vsel %vm640, %v639, %v505
      %vm649 = vcmask 326656
      %v650 = vsel %vm649, %v641, %v518
      %v651 = vsel %vm649, %v642, %v520
      %v652 = vsel %vm649, %v643, %v522
      %v653 = vsel %vm649, %v644, %v524
      %v654 = vsel %vm649, %v645, %v526
      %v655 = vsel %vm649, %v646, %v528
      %v656 = vsel %vm649, %v647, %v530
      %v657 = vsel %vm649, %v648, %v532
      %vm658 = vcmask 392192
      %v659 = vsel %vm658, %v650, %v542
      %v660 = vsel %vm658, %v651, %v544
      %v661 = vsel %vm658, %v652, %v546
      %v662 = vsel %vm658, %v653, %v548
      %v663 = vsel %vm658, %v654, %v550
      %v664 = vsel %vm658, %v655, %v552
      %v665 = vsel %vm658, %v656, %v554
      %v666 = vsel %vm658, %v657, %v556
      %vm667 = vcmask 457728
      %v668 = vsel %vm667, %v659, %v566
      %v669 = vsel %vm667, %v660, %v568
      %v670 = vsel %vm667, %v661, %v570
      %v671 = vsel %vm667, %v662, %v572
      %v672 = vsel %vm667, %v663, %v574
      %v673 = vsel %vm667, %v664, %v576
      %v674 = vsel %vm667, %v665, %v578
      %v675 = vsel %vm667, %v666, %v580
      %vm676 = vcmask 523264
      %v677 = vsel %vm676, %v668, %v590
      %v678 = vsel %vm676, %v669, %v592
      %v679 = vsel %vm676, %v670, %v594
      %v680 = vsel %vm676, %v671, %v596
      %v681 = vsel %vm676, %v672, %v598
      %v682 = vsel %vm676, %v673, %v600
      %v683 = vsel %vm676, %v674, %v602
      %v684 = vsel %vm676, %v675, %v604
      %vm685 = vcmask 588800
      %v687 = vsel %vm685, %v677, 0
      %v690 = vsel %vm685, %v678, 0
      %v693 = vsel %vm685, %v679, 0
      %v696 = vsel %vm685, %v680, 0
      %v699 = vsel %vm685, %v681, 0
      %v702 = vsel %vm685, %v682, 0
      %v705 = vsel %vm685, %v683, 0
      %v708 = vsel %vm685, %v684, 0
      %710 = vmatpush.msra.mxu0 0.0
      %711 = vmatpush.msra.mxu0 0.0
      %712 = vmatpush.msra.mxu0 0.0
      %713 = vmatpush.msra.mxu0 0.0
      %714 = vmatpush.msra.mxu0 0.0
      %715 = vmatpush.msra.mxu0 0.0
      %716 = vmatpush.msra.mxu0 0.0
      %717 = vmatpush.msra.mxu0 %v300
      %718 = vmatpush.msra.mxu0 %v299
      %719 = vmatpush.msra.mxu0 %v298
      %720 = vmatpush.msra.mxu0 %v297
      %721 = vmatpush.msra.mxu0 %v296
      %722 = vmatpush.msra.mxu0 %v295
      %723 = vmatpush.msra.mxu0 %v294
      %724 = vmatpush.msra.mxu0 %v293
      %725 = vmatpush.msra.mxu0 %v292
      %726 = vmatmul.f32.gmra.mxu0 %v687
      %v727 = vpop.f32.mrf.mxu0
      %v728 = vadd.f32 0.0, %v727
      %729 = vmatmul.f32.gmra.mxu0 %v690
      %v730 = vpop.f32.mrf.mxu0
      %v731 = vadd.f32 0.0, %v730
      %732 = vmatmul.f32.gmra.mxu0 %v693
      %v733 = vpop.f32.mrf.mxu0
      %v734 = vadd.f32 0.0, %v733
      %735 = vmatmul.f32.gmra.mxu0 %v696
      %v736 = vpop.f32.mrf.mxu0
      %v737 = vadd.f32 0.0, %v736
      %738 = vmatmul.f32.gmra.mxu0 %v699
      %v739 = vpop.f32.mrf.mxu0
      %v740 = vadd.f32 0.0, %v739
      %741 = vmatmul.f32.gmra.mxu0 %v702
      %v742 = vpop.f32.mrf.mxu0
      %v743 = vadd.f32 0.0, %v742
      %744 = vmatmul.f32.gmra.mxu0 %v705
      %v745 = vpop.f32.mrf.mxu0
      %v746 = vadd.f32 0.0, %v745
      %747 = vmatmul.f32.gmra.mxu0 %v708
      %v748 = vpop.f32.mrf.mxu0
      %v749 = vadd.f32 0.0, %v748
      %750 = vdwg.mxu0
      %751 = vst.msk [vmem:[%s231] sm:$0xff] %vm613, %v728
      %752 = vst.msk [vmem:[%s231 + $0x8] sm:$0xff] %vm613, %v731
      %753 = vst.msk [vmem:[%s231 + $0x10] sm:$0xff] %vm613, %v734
      %754 = vst.msk [vmem:[%s231 + $0x18] sm:$0xff] %vm613, %v737
      %755 = vst.msk [vmem:[%s231 + $0x20] sm:$0xff] %vm613, %v740
      %756 = vst.msk [vmem:[%s231 + $0x28] sm:$0xff] %vm613, %v743
      %757 = vst.msk [vmem:[%s231 + $0x30] sm:$0xff] %vm613, %v746
      %758 = vst.msk [vmem:[%s231 + $0x38] sm:$0xff] %vm613, %v749
      %v759 = vsel %vm613, %v728, 0.0
      %v760 = vsel %vm613, %v731, 0.0
      %v761 = vadd.f32 %v759, %v760
      %v762 = vsel %vm613, %v734, 0.0
      %v763 = vadd.f32 %v761, %v762
      %v764 = vsel %vm613, %v737, 0.0
      %v765 = vadd.f32 %v763, %v764
      %v766 = vsel %vm613, %v740, 0.0
      %v767 = vadd.f32 %v765, %v766
      %v768 = vsel %vm613, %v743, 0.0
      %v769 = vadd.f32 %v767, %v768
      %v770 = vsel %vm613, %v746, 0.0
      %v771 = vadd.f32 %v769, %v770
      %v772 = vsel %vm613, %v749, 0.0
      %v773 = vadd.f32 %v771, %v772
      %v774 = vrot.slane %v773, 4
      %v775 = vadd.f32 %v773, %v774
      %v776 = vrot.slane %v775, 2
      %v777 = vadd.f32 %v775, %v776
      %v778 = vrot.slane %v777, 1
      %v779 = vadd.f32 %v777, %v778
      %v780 = vmul.f32 %v728, %v728
      %v781 = vmul.f32 %v731, %v731
      %v782 = vmul.f32 %v734, %v734
      %v783 = vmul.f32 %v737, %v737
      %v784 = vmul.f32 %v740, %v740
      %v785 = vmul.f32 %v743, %v743
      %v786 = vmul.f32 %v746, %v746
      %v787 = vmul.f32 %v749, %v749
      %v788 = vsel %vm613, %v780, 0.0
      %v789 = vsel %vm613, %v781, 0.0
      %v790 = vadd.f32 %v788, %v789
      %v791 = vsel %vm613, %v782, 0.0
      %v792 = vadd.f32 %v790, %v791
      %v793 = vsel %vm613, %v783, 0.0
      %v794 = vadd.f32 %v792, %v793
      %v795 = vsel %vm613, %v784, 0.0
      %v796 = vadd.f32 %v794, %v795
      %v797 = vsel %vm613, %v785, 0.0
      %v798 = vadd.f32 %v796, %v797
      %v799 = vsel %vm613, %v786, 0.0
      %v800 = vadd.f32 %v798, %v799
      %v801 = vsel %vm613, %v787, 0.0
      %v802 = vadd.f32 %v800, %v801
      %v803 = vrot.slane %v802, 4
      %v804 = vadd.f32 %v802, %v803
      %v805 = vrot.slane %v804, 2
      %v806 = vadd.f32 %v804, %v805
      %v807 = vrot.slane %v806, 1
      %v808 = vadd.f32 %v806, %v807
      %v809 = vsel %vm328, %v779, %v808
      %vm810 = vcmask 58368
      %811 = vst.msk [vmem:[%s235] sm:$0x3] %vm810, %v809
      %p812 = scmp.lt.s32.totalorder %s17, 1
      %s813 = scalar_select %p812, %s17, 1
      %s814 = smul.addr %s813, 8
      %s815 = smul.addr %s814, 8
      %s816 = scalar_lea.vmem %s4, %s815
      %p817 = scmp.lt.s32.totalorder %s17, 1
      %s818 = scalar_select %p817, %s17, 1
      %s819 = smul.addr %s818, 2
      %s820 = scalar_lea.vmem %s5, %s819
      // Predicated region
      $region37: #{down_forward.4} parent=35 // pred_check
        %p821 = pneg %p124
      $region38: #{down_forward.4} parent=35 // pred_check_branch
        %823 = sbr.rel (%p821) target = $region40
      $region39: #{down_forward.4} parent=35 // pred_region
        _
      $region40: #{down_forward.4} parent=35 // pred_fallthru
        _
      // Predicated region
      $region41: #{down_forward.4} parent=35 // pred_check
        %p824 = pneg %p150
      $region42: #{down_forward.4} parent=35 // pred_check_branch
        %826 = sbr.rel (%p824) target = $region44
      $region43: #{down_forward.4} parent=35 // pred_region
        _
      $region44: #{down_forward.4} parent=35 // pred_fallthru
        _
    $region36: #{down_forward.4} parent=5 // pred_fallthru
      _
    %p827 = scmp.le.s32.totalorder 2, %s12
    // Predicated region
    $region45: #{down_forward.4} parent=5 // pred_check
      %p828 = pneg %p827
    $region46: #{down_forward.4} parent=5 // pred_check_branch
      %830 = sbr.rel (%p828) target = $region48
    $region47: #{down_forward.4} parent=5 // pred_region
      %s831 = ssub.s32 %s12, 2
      // Predicated region
      $region49: #{down_forward.4} parent=47 // pred_check
        %p832 = pneg %p130
      $region50: #{down_forward.4} parent=47 // pred_check_branch
        %834 = sbr.rel (%p832) target = $region52
      $region51: #{down_forward.4} parent=47 // pred_region
        %p835 = scmp.lt.s32.totalorder %s18, 1
        %s836 = scalar_select %p835, %s18, 1
        %s837 = smul.addr %s836, 8
        %s838 = smul.addr %s837, 8
        %s839 = scalar_lea.vmem %s4, %s838
      $region52: #{down_forward.4} parent=47 // pred_fallthru
        _
      // Predicated region
      $region53: #{down_forward.4} parent=47 // pred_check
        %p840 = pneg %p156
      $region54: #{down_forward.4} parent=47 // pred_check_branch
        %842 = sbr.rel (%p840) target = $region56
      $region55: #{down_forward.4} parent=47 // pred_region
        %p843 = scmp.lt.s32.totalorder %s18, 1
        %s844 = scalar_select %p843, %s18, 1
        %s845 = smul.addr %s844, 2
        %s846 = scalar_lea.vmem %s5, %s845
      $region56: #{down_forward.4} parent=47 // pred_fallthru
        _
    $region48: #{down_forward.4} parent=5 // pred_fallthru
      _
  $region6: #{down_forward.4} parent=0 // loop_footer
    %s16 = sadd.s32 1, %s12
  $region7: #{down_forward.4} parent=0 // loop_footer_branch
    %11 = sbr.rel target = $region3
  $region8: #{down_forward.4} parent=0 // loop_exit
    _

// kernel: down_forward.5
$region0: #{down_forward.5}
  #allocation0 [shape = 'u32[]', space=smem, size = 0x4, offset = 0x4, fixed_abs, tag = 'smem constant byte address 0x4 - core index']
  #allocation1 [shape = 'u32[72,128]{1,0:T(1,128)}', space=vmem, size = 0x9000, scoped, tag = 'internal scratch']
  %s0 = inlined_call_operand.vmem [shape: f32[16,64], index: 0, kind: input, shape index: {}]
  %s1 = inlined_call_operand.vmem [shape: f32[1,64], index: 1, kind: input, shape index: {}]
  %s2 = inlined_call_operand.vmem [shape: f32[1,64], index: 2, kind: input, shape index: {}]
  %s3 = inlined_call_operand.vmem [shape: f32[16,64], index: 3, kind: output, shape index: {}]
  %s4 = sld [smem:[#allocation0]]
  $region22: #{down_forward.5} parent=0
    _
  %s6 = ssub.s32 1, %s4
  %s7 = scalar_select 0, %s6, %s4
  // Predicated region
  $region2: #{down_forward.5} parent=0 // pred_check
    _
  $region3: #{down_forward.5} parent=0 // pred_check_branch
    %9 = sbr.rel (0) target = $region5
  $region4: #{down_forward.5} parent=0 // pred_region
    _
  $region5: #{down_forward.5} parent=0 // pred_fallthru
    _
  // Predicated region
  $region6: #{down_forward.5} parent=0 // pred_check
    _
  $region7: #{down_forward.5} parent=0 // pred_check_branch
    %11 = sbr.rel (0) target = $region9
  $region8: #{down_forward.5} parent=0 // pred_region
    _
  $region9: #{down_forward.5} parent=0 // pred_fallthru
    _
  // Predicated region
  $region10: #{down_forward.5} parent=0 // pred_check
    _
  $region11: #{down_forward.5} parent=0 // pred_check_branch
    %13 = sbr.rel (0) target = $region13
  $region12: #{down_forward.5} parent=0 // pred_region
    _
  $region13: #{down_forward.5} parent=0 // pred_fallthru
    _
  %v14 = vld [vmem:[%s0] sm:$0xff]
  %v15 = vld [vmem:[%s0 + $0x8] sm:$0xff]
  %v16 = vld [vmem:[%s1] sm:$0x1]
  %v18 = vperm.slane %v16, 0
  %v20 = vmul.f32 %v14, %v18
  %v21 = vmul.f32 %v15, %v18
  %v22 = vld [vmem:[%s2] sm:$0x1]
  %v24 = vperm.slane %v22, 0
  %v26 = vadd.f32 %v20, %v24
  %v27 = vadd.f32 %v21, %v24
  %vm28 = vcmp.ge.f32.partialorder %v26, 0.0
  %vm29 = vcmp.ge.f32.partialorder %v27, 0.0
  %v30 = vmul.f32 %v26, 0.2
  %v31 = vmul.f32 %v27, 0.2
  %v32 = vsel %vm28, %v26, %v30
  %v33 = vsel %vm29, %v27, %v31
  %vm34 = vcmask 523264
  %35 = vst.msk [vmem:[%s3] sm:$0xff] %vm34, %v32
  %36 = vst.msk [vmem:[%s3 + $0x8] sm:$0xff] %vm34, %v33
  // Predicated region
  $region14: #{down_forward.5} parent=0 // pred_check
    _
  $region15: #{down_forward.5} parent=0 // pred_check_branch
    %38 = sbr.rel (0) target = $region17
  $region16: #{down_forward.5} parent=0 // pred_region
    _
  $region17: #{down_forward.5} parent=0 // pred_fallthru
    _
  // Predicated region
  $region18: #{down_forward.5} parent=0 // pred_check
    _
  $region19: #{down_forward.5} parent=0 // pred_check_branch
    %40 = sbr.rel (0) target = $region21
  $region20: #{down_forward.5} parent=0 // pred_region
    _
  $region21: #{down_forward.5} parent=0 // pred_fallthru
    _

</llo_original>
